<compile_context>
chip_gen: v7x
topology: tpu7x:2x2x1
jax: 0.10.0
libtpu: 0.0.40
codegen_flags: <defaults>
</compile_context>

<pallas_src>
import math

import jax
import jax.numpy as jnp
from jax.experimental import pallas as pl
from jax.experimental.pallas import tpu as pltpu


def mqcma_kernel(a_ref, q_ref, main_ref, wq_ref, bq_ref, wkv_ref, bkv_ref,
                 out_ref, attn_ref=None):
    # a_ref   : (numQ,)            f32, SMEM  (softmax(alphas), precomputed)
    # q_ref   : (numQ, TB, M, D)   bf16
    # main_ref: (TB, N, D)         bf16
    # wq_ref  : (numQ, D, D)       bf16  (already scaled by 1/sqrt(D))
    # bq_ref  : (numQ, 1, D)       f32   (already scaled by 1/sqrt(D))
    # wkv_ref : (D, 2D)            bf16  ([Wk | Wv])
    # bkv_ref : (1, 2D)            f32   ([bk | bv])
    # out_ref : (TB, M, D)         f32
    # attn_ref: (TB, M, N)         f32   (optional)
    num_queries = q_ref.shape[0]
    TB, N, D = main_ref.shape
    M = q_ref.shape[2]

    # ---- shared K/V projection: one wide (TB*N, D) @ (D, 2D) MXU matmul ----
    main2 = main_ref[...].reshape(TB * N, D)                         # bf16
    kv = jnp.dot(main2, wkv_ref[...],
                 preferred_element_type=jnp.float32) + bkv_ref[...]  # (TB*N, 2D) f32
    k = kv[:, :D].reshape(TB, N, D)                                  # f32
    v = kv[:, D:].reshape(TB, N, D).astype(jnp.bfloat16)             # (TB, N, D) bf16
    # Hoist K^T out of the per-query loop: one transpose per grid step.
    kt = jnp.swapaxes(k, 1, 2).astype(jnp.bfloat16)                  # (TB, D, N) bf16

    final_attn = None
    # num_queries is small and static -> unrolled Python loop.
    for qi in range(num_queries):
        qf = q_ref[qi].reshape(TB * M, D)                            # bf16
        # 1/sqrt(D) is pre-folded into wq/bq by the wrapper.
        qp = jnp.dot(qf, wq_ref[qi],
                     preferred_element_type=jnp.float32) + bq_ref[qi]
        qp = qp.astype(jnp.bfloat16).reshape(TB, M, D)
        scores = jnp.einsum('bmd,bdn->bmn', qp, kt,
                            preferred_element_type=jnp.float32)      # (TB, M, N) f32
        s_max = jnp.max(scores, axis=-1, keepdims=True)
        p = jnp.exp(scores - s_max)
        # Fold the alpha mixing weight into the softmax normalization so the
        # (M, N) map is scaled exactly once; reciprocal goes to the EUP.
        w = a_ref[qi] * pl.reciprocal(jnp.sum(p, axis=-1, keepdims=True),
                                      approx=True)                   # (TB, M, 1)
        contrib = p * w
        final_attn = contrib if final_attn is None else final_attn + contrib

    out = jnp.einsum('bmn,bnd->bmd', final_attn.astype(jnp.bfloat16), v,
                     preferred_element_type=jnp.float32)             # (TB, M, D) f32
    out_ref[...] = out.astype(out_ref.dtype)
    if attn_ref is not None:
        attn_ref[...] = final_attn.astype(attn_ref.dtype)


def _pick_block_b(B, max_tb=8):
    """Largest divisor of B that is <= max_tb while keeping grid extent >= 2."""
    if B <= 1:
        return 1
    upper = min(max_tb, B // 2)
    best = 1
    for tb in range(1, upper + 1):
        if B % tb == 0:
            best = tb
    return best


def mqcma_forward(query_features, main_features, params, *,
                  block_b=None, return_attention=True):
    """query_features: (numQ, B, M, D) f32; main_features: (B, N, D) f32."""
    wq, bq, wk, bk, wv, bv, alphas = params
    numQ, B, M, D = query_features.shape
    N = main_features.shape[1]
    inv_scale = 1.0 / math.sqrt(float(D))

    if block_b is None:
        block_b = _pick_block_b(B)
    assert B % block_b == 0, "batch must be divisible by the batch block"
    grid_b = B // block_b

    # Fold the 1/sqrt(D) score scaling into the query projection (trace time).
    wq_s = wq * inv_scale
    bq_s = (bq * inv_scale).astype(jnp.float32)

    # Fuse K and V projections into one wide matmul: main @ [Wk | Wv].
    wkv = jnp.concatenate([wk, wv], axis=1)                  # (D, 2D)
    bkv = jnp.concatenate([bk, bv], axis=1).astype(jnp.float32)   # (1, 2D)

    # bf16 operands for all MXU work (f32 accumulation happens in-kernel).
    q_bf = query_features.astype(jnp.bfloat16)
    m_bf = main_features.astype(jnp.bfloat16)
    wq_bf = wq_s.astype(jnp.bfloat16)
    wkv_bf = wkv.astype(jnp.bfloat16)

    # Softmax over the tiny alpha vector once, pass as SMEM scalars.
    a_sm = jax.nn.softmax(alphas.reshape(-1).astype(jnp.float32))   # (numQ,)

    # ---- advisory VMEM budget sized to the real block footprint ----
    b16, b32 = 2, 4
    blk_in = (numQ * block_b * M * D * b16 + block_b * N * D * b16
              + numQ * D * D * b16 + numQ * D * b32
              + D * 2 * D * b16 + 2 * D * b32)
    blk_out = block_b * M * D * b32 + (block_b * M * N * b32 if return_attention else 0)
    tmp = (block_b * N * 2 * D * b32          # f32 K/V projection
           + 2 * block_b * N * D * b16        # K^T + V in bf16
           + 3 * block_b * M * N * b32        # scores / p / final_attn
           + block_b * M * D * b32)           # output accumulator
    est = 2 * (blk_in + blk_out) + tmp        # x2 for double-buffered pipeline
    vmem_limit = int(max(32 * 1024 * 1024, min(96 * 1024 * 1024, 2 * est)))

    if return_attention:
        out_shape = (jax.ShapeDtypeStruct((B, M, D), jnp.float32),
                     jax.ShapeDtypeStruct((B, M, N), jnp.float32))
        out_specs = [pl.BlockSpec((block_b, M, D), lambda b: (b, 0, 0)),
                     pl.BlockSpec((block_b, M, N), lambda b: (b, 0, 0))]
    else:
        out_shape = jax.ShapeDtypeStruct((B, M, D), jnp.float32)
        out_specs = pl.BlockSpec((block_b, M, D), lambda b: (b, 0, 0))

    grid_spec = pltpu.PrefetchScalarGridSpec(
        num_scalar_prefetch=0,
        grid=(grid_b,),
        in_specs=[
            pl.BlockSpec(memory_space=pltpu.MemorySpace.SMEM),            # softmax(alphas)
            pl.BlockSpec((numQ, block_b, M, D), lambda b: (0, b, 0, 0)),  # queries
            pl.BlockSpec((block_b, N, D), lambda b: (b, 0, 0)),           # main modality
            pl.BlockSpec((numQ, D, D), lambda b: (0, 0, 0)),              # Wq (stacked, scaled)
            pl.BlockSpec((numQ, 1, D), lambda b: (0, 0, 0)),              # bq (scaled)
            pl.BlockSpec((D, 2 * D), lambda b: (0, 0)),                   # [Wk | Wv]
            pl.BlockSpec((1, 2 * D), lambda b: (0, 0)),                   # [bk | bv]
        ],
        out_specs=out_specs,
    )

    return pl.pallas_call(
        mqcma_kernel,
        out_shape=out_shape,
        grid_spec=grid_spec,
        compiler_params=pltpu.CompilerParams(
            dimension_semantics=("parallel",),
            vmem_limit_bytes=vmem_limit),
    )(a_sm, q_bf, m_bf, wq_bf, bq_s, wkv_bf, bkv)


def mqcma_reference(query_features, main_features, params):
    """Pure-JAX f32 reference mirroring the PyTorch forward."""
    wq, bq, wk, bk, wv, bv, alphas = params
    numQ, B, M, D = query_features.shape
    scale = math.sqrt(float(D))
    K = main_features @ wk + bk[0]
    V = main_features @ wv + bv[0]
    attns = []
    for q in range(numQ):
        Qp = query_features[q] @ wq[q] + bq[q]
        scores = jnp.einsum('bmd,bnd->bmn', Qp, K) / scale
        attns.append(jax.nn.softmax(scores, axis=-1))
    attns = jnp.stack(attns, axis=0)
    a_sm = jax.nn.softmax(alphas[0], axis=-1)
    final_attn = jnp.einsum('q,qbmn->bmn', a_sm, attns)
    out = jnp.einsum('bmn,bnd->bmd', final_attn, V)
    return out, final_attn


def make_params(key, num_queries, d_model):
    """Deterministic synthetic parameters.  Linear weights are stored already
    transposed to [in, out] so the kernel computes x @ W + b."""
    ks = jax.random.split(key, 7)
    s = 1.0 / math.sqrt(d_model)
    wq = jax.random.uniform(ks[0], (num_queries, d_model, d_model), jnp.float32, -s, s)
    bq = jax.random.uniform(ks[1], (num_queries, 1, d_model), jnp.float32, -s, s)
    wk = jax.random.uniform(ks[2], (d_model, d_model), jnp.float32, -s, s)
    bk = jax.random.uniform(ks[3], (1, d_model), jnp.float32, -s, s)
    wv = jax.random.uniform(ks[4], (d_model, d_model), jnp.float32, -s, s)
    bv = jax.random.uniform(ks[5], (1, d_model), jnp.float32, -s, s)
    # PyTorch init is torch.ones(num_queries); perturb slightly so the alpha
    # softmax path is exercised non-trivially but deterministically.
    alphas = jnp.ones((1, num_queries), jnp.float32) + \
        0.1 * jax.random.normal(ks[6], (1, num_queries), jnp.float32)
    return (wq, bq, wk, bk, wv, bv, alphas)


if __name__ == "__main__":
    # Lane-dense small shapes: D = N = 128 keeps every output store unmasked.
    B, M, N, D, NUM_Q = 8, 8, 128, 128, 3

    key = jax.random.PRNGKey(0)
    k_q, k_m, k_p = jax.random.split(key, 3)
    query_features = jax.random.normal(k_q, (NUM_Q, B, M, D), jnp.float32)
    main_features = jax.random.normal(k_m, (B, N, D), jnp.float32)
    params = make_params(k_p, NUM_Q, D)

    out, final_attn = mqcma_forward(query_features, main_features, params,
                                    return_attention=True)
    out = jax.block_until_ready(out)
    final_attn = jax.block_until_ready(final_attn)

    out_ref, attn_ref = mqcma_reference(query_features, main_features, params)
    assert out.shape == (B, M, D) and final_attn.shape == (B, M, N)
    # bf16 MXU operands + approx reciprocal -> looser tolerance than pure f32.
    assert jnp.allclose(out, out_ref, rtol=2e-2, atol=2e-2), \
        float(jnp.max(jnp.abs(out - out_ref)))
    assert jnp.allclose(final_attn, attn_ref, rtol=2e-2, atol=2e-2), \
        float(jnp.max(jnp.abs(final_attn - attn_ref)))

    # Attention-free variant: single output, no (B, M, N) HBM writeback.
    out_only = mqcma_forward(query_features, main_features, params,
                             return_attention=False)
    out_only = jax.block_until_ready(out_only)
    assert jnp.allclose(out_only, out_ref, rtol=2e-2, atol=2e-2)

    print("KERNEL_OK")
</pallas_src>

<mosaic_0001>
module attributes {stable_mosaic.version = 11 : i64} {
  func.func @mqcma_kernel(%arg0: i32, %arg1: memref<3xf32, #tpu.memory_space<smem>>, %arg2: memref<3x4x8x128xbf16, #tpu.memory_space<vmem>>, %arg3: memref<4x128x128xbf16, #tpu.memory_space<vmem>>, %arg4: memref<3x128x128xbf16, #tpu.memory_space<vmem>>, %arg5: memref<3x1x128xf32, #tpu.memory_space<vmem>>, %arg6: memref<128x256xbf16, #tpu.memory_space<vmem>>, %arg7: memref<1x256xf32, #tpu.memory_space<vmem>>, %arg8: memref<4x8x128xf32, #tpu.memory_space<vmem>>, %arg9: memref<4x8x128xf32, #tpu.memory_space<vmem>>) attributes {dimension_semantics = [#tpu.dimension_semantics<parallel>], iteration_bounds = array<i64: 2>, scalar_prefetch = 0 : i64, scratch_operands = 0 : i64, tpu.core_type = #tpu.core_type<tc>, window_params = [{transform_indices = @transform_0, window_bounds = array<i64: 3>}, {transform_indices = @transform_1, window_bounds = array<i64: 3, 4, 8, 128>}, {transform_indices = @transform_2, window_bounds = array<i64: 4, 128, 128>}, {pipeline_mode = #tpu.pipeline_mode<synchronous>, transform_indices = @transform_3, window_bounds = array<i64: 3, 128, 128>}, {pipeline_mode = #tpu.pipeline_mode<synchronous>, transform_indices = @transform_4, window_bounds = array<i64: 3, 1, 128>}, {pipeline_mode = #tpu.pipeline_mode<synchronous>, transform_indices = @transform_5, window_bounds = array<i64: 128, 256>}, {pipeline_mode = #tpu.pipeline_mode<synchronous>, transform_indices = @transform_6, window_bounds = array<i64: 1, 256>}, {transform_indices = @transform_7, window_bounds = array<i64: 4, 8, 128>}, {transform_indices = @transform_8, window_bounds = array<i64: 4, 8, 128>}]} {
    %c0 = arith.constant 0 : index
    %c0_0 = arith.constant 0 : index
    %c0_1 = arith.constant 0 : index
    %0 = vector.load %arg3[%c0, %c0_0, %c0_1] : memref<4x128x128xbf16, #tpu.memory_space<vmem>>, vector<4x128x128xbf16>
    %1 = vector.shape_cast %0 : vector<4x128x128xbf16> to vector<512x128xbf16>
    %c0_2 = arith.constant 0 : index
    %c0_3 = arith.constant 0 : index
    %2 = vector.load %arg6[%c0_2, %c0_3] : memref<128x256xbf16, #tpu.memory_space<vmem>>, vector<128x256xbf16>
    %cst = arith.constant dense<0.000000e+00> : vector<512x256xf32>
    %3 = tpu.matmul %1, %2, %cst {dimension_numbers = #tpu.dot_dimension_numbers<[1], [0], [0], [1], [0, 0, 1, 1], [], []>} : vector<512x128xbf16>, vector<128x256xbf16>, vector<512x256xf32> -> vector<512x256xf32>
    %c0_4 = arith.constant 0 : index
    %c0_5 = arith.constant 0 : index
    %4 = vector.load %arg7[%c0_4, %c0_5] : memref<1x256xf32, #tpu.memory_space<vmem>>, vector<1x256xf32>
    %5 = vector.broadcast %4 : vector<1x256xf32> to vector<512x256xf32>
    %6 = arith.addf %3, %5 : vector<512x256xf32>
    %7 = vector.extract_strided_slice %6 {offsets = [0, 0], sizes = [512, 128], strides = [1, 1]} : vector<512x256xf32> to vector<512x128xf32>
    %8 = vector.shape_cast %7 : vector<512x128xf32> to vector<4x128x128xf32>
    %9 = vector.extract_strided_slice %6 {offsets = [0, 128], sizes = [512, 128], strides = [1, 1]} : vector<512x256xf32> to vector<512x128xf32>
    %10 = vector.shape_cast %9 : vector<512x128xf32> to vector<4x128x128xf32>
    %11 = arith.truncf %10 : vector<4x128x128xf32> to vector<4x128x128xbf16>
    %12 = tpu.transpose %8, [0, 2, 1] : vector<4x128x128xf32> -> vector<4x128x128xf32>
    %13 = arith.truncf %12 : vector<4x128x128xf32> to vector<4x128x128xbf16>
    %c0_6 = arith.constant 0 : index
    %c0_7 = arith.constant 0 : index
    %c0_8 = arith.constant 0 : index
    %c0_9 = arith.constant 0 : index
    %14 = vector.load %arg2[%c0_6, %c0_7, %c0_8, %c0_9] : memref<3x4x8x128xbf16, #tpu.memory_space<vmem>>, vector<1x4x8x128xbf16>
    %15 = vector.shape_cast %14 : vector<1x4x8x128xbf16> to vector<4x8x128xbf16>
    %16 = vector.shape_cast %15 : vector<4x8x128xbf16> to vector<32x128xbf16>
    %c0_10 = arith.constant 0 : index
    %c0_11 = arith.constant 0 : index
    %c0_12 = arith.constant 0 : index
    %17 = vector.load %arg4[%c0_10, %c0_11, %c0_12] : memref<3x128x128xbf16, #tpu.memory_space<vmem>>, vector<1x128x128xbf16>
    %18 = vector.shape_cast %17 : vector<1x128x128xbf16> to vector<128x128xbf16>
    %cst_13 = arith.constant dense<0.000000e+00> : vector<32x128xf32>
    %19 = tpu.matmul %16, %18, %cst_13 {dimension_numbers = #tpu.dot_dimension_numbers<[1], [0], [0], [1], [0, 0, 1, 1], [], []>} : vector<32x128xbf16>, vector<128x128xbf16>, vector<32x128xf32> -> vector<32x128xf32>
    %c0_14 = arith.constant 0 : index
    %c0_15 = arith.constant 0 : index
    %c0_16 = arith.constant 0 : index
    %20 = vector.load %arg5[%c0_14, %c0_15, %c0_16] : memref<3x1x128xf32, #tpu.memory_space<vmem>>, vector<1x1x128xf32>
    %21 = vector.shape_cast %20 : vector<1x1x128xf32> to vector<1x128xf32>
    %22 = vector.broadcast %21 : vector<1x128xf32> to vector<32x128xf32>
    %23 = arith.addf %19, %22 : vector<32x128xf32>
    %24 = arith.truncf %23 : vector<32x128xf32> to vector<32x128xbf16>
    %25 = vector.shape_cast %24 : vector<32x128xbf16> to vector<4x8x128xbf16>
    "tpu.trace_start"() <{level = 10 : i32, message = "bmd,bdn->bmn"}> : () -> ()
    %cst_17 = arith.constant dense<0.000000e+00> : vector<4x8x128xf32>
    %26 = tpu.matmul %25, %13, %cst_17 {dimension_numbers = #tpu.dot_dimension_numbers<[2], [1], [1], [2], [0, 0, 0, 1, 1, 2], [0], [0]>} : vector<4x8x128xbf16>, vector<4x128x128xbf16>, vector<4x8x128xf32> -> vector<4x8x128xf32>
    "tpu.trace_stop"() : () -> ()
    %cst_18 = arith.constant dense<0xFF800000> : vector<4x8xf32>
    %27 = vector.multi_reduction <maximumf>, %26, %cst_18 [2] : vector<4x8x128xf32> to vector<4x8xf32>
    %28 = vector.shape_cast %27 : vector<4x8xf32> to vector<4x8x1xf32>
    %29 = vector.broadcast %28 : vector<4x8x1xf32> to vector<4x8x128xf32>
    %30 = arith.subf %26, %29 : vector<4x8x128xf32>
    %31 = math.exp %30 : vector<4x8x128xf32>
    %c0_19 = arith.constant 0 : index
    %32 = memref.load %arg1[%c0_19] : memref<3xf32, #tpu.memory_space<smem>>
    %cst_20 = arith.constant dense<0.000000e+00> : vector<4x8xf32>
    %33 = vector.multi_reduction <add>, %31, %cst_20 [2] : vector<4x8x128xf32> to vector<4x8xf32>
    %34 = vector.shape_cast %33 : vector<4x8xf32> to vector<4x8x1xf32>
    %35 = tpu.reciprocal %34 {approx = true} : vector<4x8x1xf32> -> vector<4x8x1xf32>
    %36 = vector.broadcast %32 : f32 to vector<4x8x1xf32>
    %37 = arith.mulf %36, %35 : vector<4x8x1xf32>
    %38 = vector.broadcast %37 : vector<4x8x1xf32> to vector<4x8x128xf32>
    %39 = arith.mulf %31, %38 : vector<4x8x128xf32>
    %c1 = arith.constant 1 : index
    %c0_21 = arith.constant 0 : index
    %c0_22 = arith.constant 0 : index
    %c0_23 = arith.constant 0 : index
    %40 = vector.load %arg2[%c1, %c0_21, %c0_22, %c0_23] : memref<3x4x8x128xbf16, #tpu.memory_space<vmem>>, vector<1x4x8x128xbf16>
    %41 = vector.shape_cast %40 : vector<1x4x8x128xbf16> to vector<4x8x128xbf16>
    %42 = vector.shape_cast %41 : vector<4x8x128xbf16> to vector<32x128xbf16>
    %c1_24 = arith.constant 1 : index
    %c0_25 = arith.constant 0 : index
    %c0_26 = arith.constant 0 : index
    %43 = vector.load %arg4[%c1_24, %c0_25, %c0_26] : memref<3x128x128xbf16, #tpu.memory_space<vmem>>, vector<1x128x128xbf16>
    %44 = vector.shape_cast %43 : vector<1x128x128xbf16> to vector<128x128xbf16>
    %cst_27 = arith.constant dense<0.000000e+00> : vector<32x128xf32>
    %45 = tpu.matmul %42, %44, %cst_27 {dimension_numbers = #tpu.dot_dimension_numbers<[1], [0], [0], [1], [0, 0, 1, 1], [], []>} : vector<32x128xbf16>, vector<128x128xbf16>, vector<32x128xf32> -> vector<32x128xf32>
    %c1_28 = arith.constant 1 : index
    %c0_29 = arith.constant 0 : index
    %c0_30 = arith.constant 0 : index
    %46 = vector.load %arg5[%c1_28, %c0_29, %c0_30] : memref<3x1x128xf32, #tpu.memory_space<vmem>>, vector<1x1x128xf32>
    %47 = vector.shape_cast %46 : vector<1x1x128xf32> to vector<1x128xf32>
    %48 = vector.broadcast %47 : vector<1x128xf32> to vector<32x128xf32>
    %49 = arith.addf %45, %48 : vector<32x128xf32>
    %50 = arith.truncf %49 : vector<32x128xf32> to vector<32x128xbf16>
    %51 = vector.shape_cast %50 : vector<32x128xbf16> to vector<4x8x128xbf16>
    "tpu.trace_start"() <{level = 10 : i32, message = "bmd,bdn->bmn"}> : () -> ()
    %cst_31 = arith.constant dense<0.000000e+00> : vector<4x8x128xf32>
    %52 = tpu.matmul %51, %13, %cst_31 {dimension_numbers = #tpu.dot_dimension_numbers<[2], [1], [1], [2], [0, 0, 0, 1, 1, 2], [0], [0]>} : vector<4x8x128xbf16>, vector<4x128x128xbf16>, vector<4x8x128xf32> -> vector<4x8x128xf32>
    "tpu.trace_stop"() : () -> ()
    %cst_32 = arith.constant dense<0xFF800000> : vector<4x8xf32>
    %53 = vector.multi_reduction <maximumf>, %52, %cst_32 [2] : vector<4x8x128xf32> to vector<4x8xf32>
    %54 = vector.shape_cast %53 : vector<4x8xf32> to vector<4x8x1xf32>
    %55 = vector.broadcast %54 : vector<4x8x1xf32> to vector<4x8x128xf32>
    %56 = arith.subf %52, %55 : vector<4x8x128xf32>
    %57 = math.exp %56 : vector<4x8x128xf32>
    %c1_33 = arith.constant 1 : index
    %58 = memref.load %arg1[%c1_33] : memref<3xf32, #tpu.memory_space<smem>>
    %cst_34 = arith.constant dense<0.000000e+00> : vector<4x8xf32>
    %59 = vector.multi_reduction <add>, %57, %cst_34 [2] : vector<4x8x128xf32> to vector<4x8xf32>
    %60 = vector.shape_cast %59 : vector<4x8xf32> to vector<4x8x1xf32>
    %61 = tpu.reciprocal %60 {approx = true} : vector<4x8x1xf32> -> vector<4x8x1xf32>
    %62 = vector.broadcast %58 : f32 to vector<4x8x1xf32>
    %63 = arith.mulf %62, %61 : vector<4x8x1xf32>
    %64 = vector.broadcast %63 : vector<4x8x1xf32> to vector<4x8x128xf32>
    %65 = arith.mulf %57, %64 : vector<4x8x128xf32>
    %66 = arith.addf %39, %65 : vector<4x8x128xf32>
    %c2 = arith.constant 2 : index
    %c0_35 = arith.constant 0 : index
    %c0_36 = arith.constant 0 : index
    %c0_37 = arith.constant 0 : index
    %67 = vector.load %arg2[%c2, %c0_35, %c0_36, %c0_37] : memref<3x4x8x128xbf16, #tpu.memory_space<vmem>>, vector<1x4x8x128xbf16>
    %68 = vector.shape_cast %67 : vector<1x4x8x128xbf16> to vector<4x8x128xbf16>
    %69 = vector.shape_cast %68 : vector<4x8x128xbf16> to vector<32x128xbf16>
    %c2_38 = arith.constant 2 : index
    %c0_39 = arith.constant 0 : index
    %c0_40 = arith.constant 0 : index
    %70 = vector.load %arg4[%c2_38, %c0_39, %c0_40] : memref<3x128x128xbf16, #tpu.memory_space<vmem>>, vector<1x128x128xbf16>
    %71 = vector.shape_cast %70 : vector<1x128x128xbf16> to vector<128x128xbf16>
    %cst_41 = arith.constant dense<0.000000e+00> : vector<32x128xf32>
    %72 = tpu.matmul %69, %71, %cst_41 {dimension_numbers = #tpu.dot_dimension_numbers<[1], [0], [0], [1], [0, 0, 1, 1], [], []>} : vector<32x128xbf16>, vector<128x128xbf16>, vector<32x128xf32> -> vector<32x128xf32>
    %c2_42 = arith.constant 2 : index
    %c0_43 = arith.constant 0 : index
    %c0_44 = arith.constant 0 : index
    %73 = vector.load %arg5[%c2_42, %c0_43, %c0_44] : memref<3x1x128xf32, #tpu.memory_space<vmem>>, vector<1x1x128xf32>
    %74 = vector.shape_cast %73 : vector<1x1x128xf32> to vector<1x128xf32>
    %75 = vector.broadcast %74 : vector<1x128xf32> to vector<32x128xf32>
    %76 = arith.addf %72, %75 : vector<32x128xf32>
    %77 = arith.truncf %76 : vector<32x128xf32> to vector<32x128xbf16>
    %78 = vector.shape_cast %77 : vector<32x128xbf16> to vector<4x8x128xbf16>
    "tpu.trace_start"() <{level = 10 : i32, message = "bmd,bdn->bmn"}> : () -> ()
    %cst_45 = arith.constant dense<0.000000e+00> : vector<4x8x128xf32>
    %79 = tpu.matmul %78, %13, %cst_45 {dimension_numbers = #tpu.dot_dimension_numbers<[2], [1], [1], [2], [0, 0, 0, 1, 1, 2], [0], [0]>} : vector<4x8x128xbf16>, vector<4x128x128xbf16>, vector<4x8x128xf32> -> vector<4x8x128xf32>
    "tpu.trace_stop"() : () -> ()
    %cst_46 = arith.constant dense<0xFF800000> : vector<4x8xf32>
    %80 = vector.multi_reduction <maximumf>, %79, %cst_46 [2] : vector<4x8x128xf32> to vector<4x8xf32>
    %81 = vector.shape_cast %80 : vector<4x8xf32> to vector<4x8x1xf32>
    %82 = vector.broadcast %81 : vector<4x8x1xf32> to vector<4x8x128xf32>
    %83 = arith.subf %79, %82 : vector<4x8x128xf32>
    %84 = math.exp %83 : vector<4x8x128xf32>
    %c2_47 = arith.constant 2 : index
    %85 = memref.load %arg1[%c2_47] : memref<3xf32, #tpu.memory_space<smem>>
    %cst_48 = arith.constant dense<0.000000e+00> : vector<4x8xf32>
    %86 = vector.multi_reduction <add>, %84, %cst_48 [2] : vector<4x8x128xf32> to vector<4x8xf32>
    %87 = vector.shape_cast %86 : vector<4x8xf32> to vector<4x8x1xf32>
    %88 = tpu.reciprocal %87 {approx = true} : vector<4x8x1xf32> -> vector<4x8x1xf32>
    %89 = vector.broadcast %85 : f32 to vector<4x8x1xf32>
    %90 = arith.mulf %89, %88 : vector<4x8x1xf32>
    %91 = vector.broadcast %90 : vector<4x8x1xf32> to vector<4x8x128xf32>
    %92 = arith.mulf %84, %91 : vector<4x8x128xf32>
    %93 = arith.addf %66, %92 : vector<4x8x128xf32>
    %94 = arith.truncf %93 : vector<4x8x128xf32> to vector<4x8x128xbf16>
    "tpu.trace_start"() <{level = 10 : i32, message = "bmn,bnd->bmd"}> : () -> ()
    %cst_49 = arith.constant dense<0.000000e+00> : vector<4x8x128xf32>
    %95 = tpu.matmul %94, %11, %cst_49 {dimension_numbers = #tpu.dot_dimension_numbers<[2], [1], [1], [2], [0, 0, 0, 1, 1, 2], [0], [0]>} : vector<4x8x128xbf16>, vector<4x128x128xbf16>, vector<4x8x128xf32> -> vector<4x8x128xf32>
    "tpu.trace_stop"() : () -> ()
    %c0_50 = arith.constant 0 : index
    %c0_51 = arith.constant 0 : index
    %c0_52 = arith.constant 0 : index
    %96 = vector.load %arg8[%c0_50, %c0_51, %c0_52] : memref<4x8x128xf32, #tpu.memory_space<vmem>>, vector<4x8x128xf32>
    tpu.vector_store %arg8[%c0_50, %c0_51, %c0_52], %95 {strides = array<i32>} : memref<4x8x128xf32, #tpu.memory_space<vmem>>, vector<4x8x128xf32>,
    %c0_53 = arith.constant 0 : index
    %c0_54 = arith.constant 0 : index
    %c0_55 = arith.constant 0 : index
    %97 = vector.load %arg9[%c0_53, %c0_54, %c0_55] : memref<4x8x128xf32, #tpu.memory_space<vmem>>, vector<4x8x128xf32>
    tpu.vector_store %arg9[%c0_53, %c0_54, %c0_55], %93 {strides = array<i32>} : memref<4x8x128xf32, #tpu.memory_space<vmem>>, vector<4x8x128xf32>,
    return
  }
  func.func @transform_0(%arg0: i32) -> i32 {
    %c0_i32 = arith.constant 0 : i32
    %c0_i32_0 = arith.constant 0 : i32
    return %c0_i32 : i32
  }
  func.func @transform_1(%arg0: i32) -> (i32, i32, i32, i32) {
    %c0_i32 = arith.constant 0 : i32
    %c0_i32_0 = arith.constant 0 : i32
    %c0_i32_1 = arith.constant 0 : i32
    %c0_i32_2 = arith.constant 0 : i32
    return %c0_i32, %arg0, %c0_i32_0, %c0_i32_1 : i32, i32, i32, i32
  }
  func.func @transform_2(%arg0: i32) -> (i32, i32, i32) {
    %c0_i32 = arith.constant 0 : i32
    %c0_i32_0 = arith.constant 0 : i32
    %c0_i32_1 = arith.constant 0 : i32
    return %arg0, %c0_i32, %c0_i32_0 : i32, i32, i32
  }
  func.func @transform_3(%arg0: i32) -> (i32, i32, i32) {
    %c0_i32 = arith.constant 0 : i32
    %c0_i32_0 = arith.constant 0 : i32
    %c0_i32_1 = arith.constant 0 : i32
    %c0_i32_2 = arith.constant 0 : i32
    return %c0_i32, %c0_i32_0, %c0_i32_1 : i32, i32, i32
  }
  func.func @transform_4(%arg0: i32) -> (i32, i32, i32) {
    %c0_i32 = arith.constant 0 : i32
    %c0_i32_0 = arith.constant 0 : i32
    %c0_i32_1 = arith.constant 0 : i32
    %c0_i32_2 = arith.constant 0 : i32
    return %c0_i32, %c0_i32_0, %c0_i32_1 : i32, i32, i32
  }
  func.func @transform_5(%arg0: i32) -> (i32, i32) {
    %c0_i32 = arith.constant 0 : i32
    %c0_i32_0 = arith.constant 0 : i32
    %c0_i32_1 = arith.constant 0 : i32
    return %c0_i32, %c0_i32_0 : i32, i32
  }
  func.func @transform_6(%arg0: i32) -> (i32, i32) {
    %c0_i32 = arith.constant 0 : i32
    %c0_i32_0 = arith.constant 0 : i32
    %c0_i32_1 = arith.constant 0 : i32
    return %c0_i32, %c0_i32_0 : i32, i32
  }
  func.func @transform_7(%arg0: i32) -> (i32, i32, i32) {
    %c0_i32 = arith.constant 0 : i32
    %c0_i32_0 = arith.constant 0 : i32
    %c0_i32_1 = arith.constant 0 : i32
    return %arg0, %c0_i32, %c0_i32_0 : i32, i32, i32
  }
  func.func @transform_8(%arg0: i32) -> (i32, i32, i32) {
    %c0_i32 = arith.constant 0 : i32
    %c0_i32_0 = arith.constant 0 : i32
    %c0_i32_1 = arith.constant 0 : i32
    return %arg0, %c0_i32, %c0_i32_0 : i32, i32, i32
  }
}

</mosaic_0001>

<llo_original>
// kernel: tpu_custom_call.1
$region0: #{tpu_custom_call.1}
  #allocation0 [shape = 'u32[]', space=smem, size = 0x4, offset = 0x4, fixed_abs, tag = 'smem constant byte address 0x4 - core index']
  #allocation1 [shape = 'u32[144,128]{1,0:T(1,128)}', space=vmem, size = 0x12000, scoped, tag = 'internal scratch']
  #allocation15 [shape = 's32[]', space=sflag, size = 0x4, offset = 0, fixed_abs, tag = 'sflag constant byte address 0x0 - dummy sync flag']
  %s0 = inlined_call_operand.hbm [shape: f32[3], index: 0, kind: input, shape index: {}]
  %s1 = inlined_call_operand.hbm [shape: bf16[3,8,8,128], index: 1, kind: input, shape index: {}]
  %s2 = inlined_call_operand.hbm [shape: bf16[8,128,128], index: 2, kind: input, shape index: {}]
  %s3 = inlined_call_operand.hbm [shape: bf16[3,128,128], index: 3, kind: input, shape index: {}]
  %s4 = inlined_call_operand.vmem [shape: f32[3,1,128], index: 4, kind: input, shape index: {}]
  %s5 = inlined_call_operand.hbm [shape: bf16[128,256], index: 5, kind: input, shape index: {}]
  %s6 = inlined_call_operand.vmem [shape: f32[1,256], index: 6, kind: input, shape index: {}]
  %s7 = inlined_call_operand.hbm [shape: f32[8,8,128], index: 7, kind: output, shape index: {0}]
  %s8 = inlined_call_operand.hbm [shape: f32[8,8,128], index: 8, kind: output, shape index: {1}]
  %9 = xla_tuple %s7, %s8
  %s10 = sld [smem:[#allocation0]]
  $region89: #{tpu_custom_call.1} parent=0
    _
  %s12 = ssub.s32 1, %s10
  %s13 = scalar_select 0, %s12, %s10
  $region1: #{tpu_custom_call.1} parent=0
    #allocation2 [shape = 'u8[512]{0}', space=smem, size = 0x200, scoped, tag = 'input window, operand 0, single buffered']
    #allocation3 [shape = 's32[2]{0}', space=sflag, size = 0x8, scoped, tag = 'scoped memory for tpu_custom_call.1']
    #allocation4 [shape = 's32[2]{0}', space=sflag, size = 0x8, scoped, tag = 'scoped memory for tpu_custom_call.1']
    #allocation5 [shape = 's32[2]{0}', space=sflag, size = 0x8, scoped, tag = 'scoped memory for tpu_custom_call.1']
    #allocation6 [shape = 'u8[49152]{0}', space=vmem, size = 0xc000, scoped, tag = 'input window, operand 1']
    #allocation7 [shape = 'u8[262144]{0}', space=vmem, size = 0x40000, scoped, tag = 'input window, operand 2']
    #allocation8 [shape = 's32[2]{0}', space=sflag, size = 0x8, scoped, tag = 'scoped memory for tpu_custom_call.1']
    #allocation9 [shape = 'u8[98304]{0}', space=vmem, size = 0x18000, scoped, tag = 'input window, operand 3, single buffered']
    #allocation10 [shape = 'u8[65536]{0}', space=vmem, size = 0x10000, scoped, tag = 'input window, operand 5, single buffered']
    #allocation11 [shape = 's32[1]{0}', space=sflag, size = 0x4, scoped, tag = 'scoped memory for tpu_custom_call.1']
    #allocation12 [shape = 'u8[32768]{0}', space=vmem, size = 0x8000, scoped, tag = 'output window, operand 0']
    #allocation13 [shape = 'u8[32768]{0}', space=vmem, size = 0x8000, scoped, tag = 'output window, operand 1']
    #allocation14 [shape = 's32[2]{0}', space=sflag, size = 0x8, scoped, tag = 'scoped memory for tpu_custom_call.1']
    %14 = vsyncpa [#allocation5], 0
    %15 = vsyncpa [#allocation3], 0
    %s16 = scalar_lea.sflag [#allocation3], 1
    %17 = vsyncpa %s16, 0
    %18 = vsyncpa [#allocation8], 0
    %s19 = scalar_lea.sflag [#allocation8], 1
    %20 = vsyncpa %s19, 0
    %21 = vsyncpa [#allocation11], 0
    %22 = vsyncpa [#allocation4], 0
    %s23 = scalar_lea.sflag [#allocation4], 1
    %24 = vsyncpa %s23, 0
    %25 = vsyncpa [#allocation14], 0
    %s26 = scalar_lea.sflag [#allocation14], 1
    %27 = vsyncpa %s26, 0
    loop: start=0, step=1, limit=4
    $region2: #{tpu_custom_call.1} parent=1 // loop_pre_header
      _
    $region3: #{tpu_custom_call.1} parent=1 // loop_header
      %s29 = sphi 0, %s33
      %p30 = scmp.ge.s32.totalorder %s29, 4
      %s37 = sphi 0, %s37
      %s39 = sphi 0, %s37
      %s40 = sphi 0, %s39
      %s54 = sphi 0, %s40
      %s60 = sphi 0, %s62
      %s63 = sphi 0, %s60
      %s64 = sphi 0, %s63
      %s80 = sphi 0, %s64
      %s86 = sphi 0, %s88
      %s89 = sphi 0, %s86
      %s90 = sphi 0, %s89
      %s106 = sphi 0, %s90
      %s110 = sphi 0, %s110
      %s112 = sphi 0, %s110
      %s113 = sphi 0, %s112
      %s127 = sphi 0, %s113
      %s131 = sphi 0, %s131
      %s133 = sphi 0, %s131
      %s134 = sphi 0, %s133
      %s148 = sphi 0, %s134
      %s152 = sphi 0, %s152
      %s154 = sphi 0, %s152
      %s155 = sphi 0, %s154
      %s169 = sphi 0, %s155
      %s173 = sphi 0, %s173
      %s175 = sphi 0, %s173
      %s176 = sphi 0, %s175
      %s190 = sphi 0, %s176
      %s196 = sphi 0, %s198
      %s199 = sphi 0, %s196
      %s200 = sphi 0, %s199
      %s216 = sphi 0, %s200
      %s222 = sphi 0, %s224
      %s225 = sphi 0, %s222
      %s226 = sphi 0, %s225
      %s242 = sphi 0, %s226
    $region4: #{tpu_custom_call.1} parent=1 // loop_header_branch
      %32 = sbr.rel (%p30) target = $region8
    $region5: #{tpu_custom_call.1} parent=1 // loop_body
      %s34 = ssub.s32 %s29, 1
      %s35 = ssub.s32 %s29, 2
      %s36 = sadd.s32 %s29, 1
      %s38 = sadd.s32 %s37, 1
      %p41 = scmp.eq.s32.totalorder %s29, 1
      %p42 = scmp.ne.s32.totalorder %s37, %s39
      %p43 = scmp.eq.s32.totalorder %s29, 0
      %p44 = por %p42, %p43
      %p45 = scmp.ne.s32.totalorder %s37, %s39
      %p46 = scmp.eq.s32.totalorder %s34, 1
      %p47 = por %p45, %p46
      %p48 = scmp.ne.s32.totalorder %s39, %s40
      %p49 = scmp.eq.s32.totalorder %s34, 0
      %p50 = por %p48, %p49
      %p51 = scmp.ne.s32.totalorder %s39, %s40
      %p52 = scmp.eq.s32.totalorder %s35, 1
      %p53 = por %p51, %p52
      %p55 = scmp.ne.s32.totalorder %s40, %s54
      %p56 = scmp.eq.s32.totalorder %s35, 0
      %p57 = por %p55, %p56
      %s58 = ssub.s32 %s29, %s36
      %p59 = scmp.eq.s32.totalorder %s58, 0
      %s61 = sadd.s32 %s60, 1
      %s62 = scalar_select %p59, %s60, %s61
      %p65 = pneg %p59
      %p66 = scmp.eq.s32.totalorder %s29, 1
      %p67 = por %p65, %p66
      %p68 = scmp.ne.s32.totalorder %s60, %s63
      %p69 = scmp.eq.s32.totalorder %s29, 0
      %p70 = por %p68, %p69
      %p71 = scmp.ne.s32.totalorder %s60, %s63
      %p72 = scmp.eq.s32.totalorder %s34, 1
      %p73 = por %p71, %p72
      %p74 = scmp.ne.s32.totalorder %s63, %s64
      %p75 = scmp.eq.s32.totalorder %s34, 0
      %p76 = por %p74, %p75
      %p77 = scmp.ne.s32.totalorder %s63, %s64
      %p78 = scmp.eq.s32.totalorder %s35, 1
      %p79 = por %p77, %p78
      %p81 = scmp.ne.s32.totalorder %s64, %s80
      %p82 = scmp.eq.s32.totalorder %s35, 0
      %p83 = por %p81, %p82
      %s84 = ssub.s32 %s29, %s36
      %p85 = scmp.eq.s32.totalorder %s84, 0
      %s87 = sadd.s32 %s86, 1
      %s88 = scalar_select %p85, %s86, %s87
      %p91 = pneg %p85
      %p92 = scmp.eq.s32.totalorder %s29, 1
      %p93 = por %p91, %p92
      %p94 = scmp.ne.s32.totalorder %s86, %s89
      %p95 = scmp.eq.s32.totalorder %s29, 0
      %p96 = por %p94, %p95
      %p97 = scmp.ne.s32.totalorder %s86, %s89
      %p98 = scmp.eq.s32.totalorder %s34, 1
      %p99 = por %p97, %p98
      %p100 = scmp.ne.s32.totalorder %s89, %s90
      %p101 = scmp.eq.s32.totalorder %s34, 0
      %p102 = por %p100, %p101
      %p103 = scmp.ne.s32.totalorder %s89, %s90
      %p104 = scmp.eq.s32.totalorder %s35, 1
      %p105 = por %p103, %p104
      %p107 = scmp.ne.s32.totalorder %s90, %s106
      %p108 = scmp.eq.s32.totalorder %s35, 0
      %p109 = por %p107, %p108
      %s111 = sadd.s32 %s110, 1
      %p114 = scmp.eq.s32.totalorder %s29, 1
      %p115 = scmp.ne.s32.totalorder %s110, %s112
      %p116 = scmp.eq.s32.totalorder %s29, 0
      %p117 = por %p115, %p116
      %p118 = scmp.ne.s32.totalorder %s110, %s112
      %p119 = scmp.eq.s32.totalorder %s34, 1
      %p120 = por %p118, %p119
      %p121 = scmp.ne.s32.totalorder %s112, %s113
      %p122 = scmp.eq.s32.totalorder %s34, 0
      %p123 = por %p121, %p122
      %p124 = scmp.ne.s32.totalorder %s112, %s113
      %p125 = scmp.eq.s32.totalorder %s35, 1
      %p126 = por %p124, %p125
      %p128 = scmp.ne.s32.totalorder %s113, %s127
      %p129 = scmp.eq.s32.totalorder %s35, 0
      %p130 = por %p128, %p129
      %s132 = sadd.s32 %s131, 1
      %p135 = scmp.eq.s32.totalorder %s29, 1
      %p136 = scmp.ne.s32.totalorder %s131, %s133
      %p137 = scmp.eq.s32.totalorder %s29, 0
      %p138 = por %p136, %p137
      %p139 = scmp.ne.s32.totalorder %s131, %s133
      %p140 = scmp.eq.s32.totalorder %s34, 1
      %p141 = por %p139, %p140
      %p142 = scmp.ne.s32.totalorder %s133, %s134
      %p143 = scmp.eq.s32.totalorder %s34, 0
      %p144 = por %p142, %p143
      %p145 = scmp.ne.s32.totalorder %s133, %s134
      %p146 = scmp.eq.s32.totalorder %s35, 1
      %p147 = por %p145, %p146
      %p149 = scmp.ne.s32.totalorder %s134, %s148
      %p150 = scmp.eq.s32.totalorder %s35, 0
      %p151 = por %p149, %p150
      %s153 = sadd.s32 %s152, 1
      %p156 = scmp.eq.s32.totalorder %s29, 1
      %p157 = scmp.ne.s32.totalorder %s152, %s154
      %p158 = scmp.eq.s32.totalorder %s29, 0
      %p159 = por %p157, %p158
      %p160 = scmp.ne.s32.totalorder %s152, %s154
      %p161 = scmp.eq.s32.totalorder %s34, 1
      %p162 = por %p160, %p161
      %p163 = scmp.ne.s32.totalorder %s154, %s155
      %p164 = scmp.eq.s32.totalorder %s34, 0
      %p165 = por %p163, %p164
      %p166 = scmp.ne.s32.totalorder %s154, %s155
      %p167 = scmp.eq.s32.totalorder %s35, 1
      %p168 = por %p166, %p167
      %p170 = scmp.ne.s32.totalorder %s155, %s169
      %p171 = scmp.eq.s32.totalorder %s35, 0
      %p172 = por %p170, %p171
      %s174 = sadd.s32 %s173, 1
      %p177 = scmp.eq.s32.totalorder %s29, 1
      %p178 = scmp.ne.s32.totalorder %s173, %s175
      %p179 = scmp.eq.s32.totalorder %s29, 0
      %p180 = por %p178, %p179
      %p181 = scmp.ne.s32.totalorder %s173, %s175
      %p182 = scmp.eq.s32.totalorder %s34, 1
      %p183 = por %p181, %p182
      %p184 = scmp.ne.s32.totalorder %s175, %s176
      %p185 = scmp.eq.s32.totalorder %s34, 0
      %p186 = por %p184, %p185
      %p187 = scmp.ne.s32.totalorder %s175, %s176
      %p188 = scmp.eq.s32.totalorder %s35, 1
      %p189 = por %p187, %p188
      %p191 = scmp.ne.s32.totalorder %s176, %s190
      %p192 = scmp.eq.s32.totalorder %s35, 0
      %p193 = por %p191, %p192
      %s194 = ssub.s32 %s29, %s36
      %p195 = scmp.eq.s32.totalorder %s194, 0
      %s197 = sadd.s32 %s196, 1
      %s198 = scalar_select %p195, %s196, %s197
      %p201 = pneg %p195
      %p202 = scmp.eq.s32.totalorder %s29, 1
      %p203 = por %p201, %p202
      %p204 = scmp.ne.s32.totalorder %s196, %s199
      %p205 = scmp.eq.s32.totalorder %s29, 0
      %p206 = por %p204, %p205
      %p207 = scmp.ne.s32.totalorder %s196, %s199
      %p208 = scmp.eq.s32.totalorder %s34, 1
      %p209 = por %p207, %p208
      %p210 = scmp.ne.s32.totalorder %s199, %s200
      %p211 = scmp.eq.s32.totalorder %s34, 0
      %p212 = por %p210, %p211
      %p213 = scmp.ne.s32.totalorder %s199, %s200
      %p214 = scmp.eq.s32.totalorder %s35, 1
      %p215 = por %p213, %p214
      %p217 = scmp.ne.s32.totalorder %s200, %s216
      %p218 = scmp.eq.s32.totalorder %s35, 0
      %p219 = por %p217, %p218
      %s220 = ssub.s32 %s29, %s36
      %p221 = scmp.eq.s32.totalorder %s220, 0
      %s223 = sadd.s32 %s222, 1
      %s224 = scalar_select %p221, %s222, %s223
      %p227 = pneg %p221
      %p228 = scmp.eq.s32.totalorder %s29, 1
      %p229 = por %p227, %p228
      %p230 = scmp.ne.s32.totalorder %s222, %s225
      %p231 = scmp.eq.s32.totalorder %s29, 0
      %p232 = por %p230, %p231
      %p233 = scmp.ne.s32.totalorder %s222, %s225
      %p234 = scmp.eq.s32.totalorder %s34, 1
      %p235 = por %p233, %p234
      %p236 = scmp.ne.s32.totalorder %s225, %s226
      %p237 = scmp.eq.s32.totalorder %s34, 0
      %p238 = por %p236, %p237
      %p239 = scmp.ne.s32.totalorder %s225, %s226
      %p240 = scmp.eq.s32.totalorder %s35, 1
      %p241 = por %p239, %p240
      %p243 = scmp.ne.s32.totalorder %s226, %s242
      %p244 = scmp.eq.s32.totalorder %s35, 0
      %p245 = por %p243, %p244
      %p246 = scmp.le.s32.totalorder 1, %s29
      %p247 = scmp.lt.s32.totalorder %s29, 3
      %p248 = pnand %p246, %p247
      %p249 = pneg %p248
      // Predicated region
      $region9: #{tpu_custom_call.1} parent=5 // pred_check
        _
      $region10: #{tpu_custom_call.1} parent=5 // pred_check_branch
        %251 = sbr.rel (%p248) target = $region12
      $region11: #{tpu_custom_call.1} parent=5 // pred_region
        %s252 = ssub.s32 %s29, 1
        // Predicated region
        $region13: #{tpu_custom_call.1} parent=11 // pred_check
          %p253 = pneg %p50
        $region14: #{tpu_custom_call.1} parent=11 // pred_check_branch
          %255 = sbr.rel (%p253) target = $region16
        $region15: #{tpu_custom_call.1} parent=11 // pred_region
          %s257 = ssub.s32 16, 16
          %258 = vsyncadd [#allocation5], %s257
          %261 = dma.hbm_to_smem %s0, 16, [#allocation2], [#allocation5]
        $region16: #{tpu_custom_call.1} parent=11 // pred_fallthru
          _
        // Predicated region
        $region17: #{tpu_custom_call.1} parent=11 // pred_check
          %p262 = pneg %p123
        $region18: #{tpu_custom_call.1} parent=11 // pred_check_branch
          %264 = sbr.rel (%p262) target = $region20
        $region19: #{tpu_custom_call.1} parent=11 // pred_region
          %s266 = ssub.s32 3072, 3072
          %267 = vsyncadd [#allocation8], %s266
          %s268 = sshll.u32 [#allocation9], 4
          %s269 = int_to_ptr.vmem [resolvable:$true] %s268
          %274 = dma.hbm_to_vmem [thread:$0]  %s3, 3072, %s269, [#allocation8], 64, 64, 4
        $region20: #{tpu_custom_call.1} parent=11 // pred_fallthru
          _
        // Predicated region
        $region21: #{tpu_custom_call.1} parent=11 // pred_check
          %p275 = pneg %p144
        $region22: #{tpu_custom_call.1} parent=11 // pred_check_branch
          %277 = sbr.rel (%p275) target = $region24
        $region23: #{tpu_custom_call.1} parent=11 // pred_region
          _
        $region24: #{tpu_custom_call.1} parent=11 // pred_fallthru
          _
        // Predicated region
        $region25: #{tpu_custom_call.1} parent=11 // pred_check
          %p278 = pneg %p165
        $region26: #{tpu_custom_call.1} parent=11 // pred_check_branch
          %280 = sbr.rel (%p278) target = $region28
        $region27: #{tpu_custom_call.1} parent=11 // pred_region
          %s282 = ssub.s32 2048, 2048
          %283 = vsyncadd [#allocation11], %s282
          %s284 = sshll.u32 [#allocation10], 4
          %s285 = int_to_ptr.vmem [resolvable:$true] %s284
          %290 = dma.hbm_to_vmem [thread:$0]  %s5, 2048, %s285, [#allocation11], 128, 128, 8
        $region28: #{tpu_custom_call.1} parent=11 // pred_fallthru
          _
        // Predicated region
        $region29: #{tpu_custom_call.1} parent=11 // pred_check
          %p291 = pneg %p186
        $region30: #{tpu_custom_call.1} parent=11 // pred_check_branch
          %293 = sbr.rel (%p291) target = $region32
        $region31: #{tpu_custom_call.1} parent=11 // pred_region
          _
        $region32: #{tpu_custom_call.1} parent=11 // pred_fallthru
          _
      $region12: #{tpu_custom_call.1} parent=5 // pred_fallthru
        _
      %p294 = scmp.lt.s32.totalorder %s29, 2
      // Predicated region
      $region33: #{tpu_custom_call.1} parent=5 // pred_check
        %p295 = pneg %p294
      $region34: #{tpu_custom_call.1} parent=5 // pred_check_branch
        %297 = sbr.rel (%p295) target = $region36
      $region35: #{tpu_custom_call.1} parent=5 // pred_region
        // Predicated region
        $region37: #{tpu_custom_call.1} parent=35 // pred_check
          %p298 = pneg %p70
        $region38: #{tpu_custom_call.1} parent=35 // pred_check_branch
          %300 = sbr.rel (%p298) target = $region40
        $region39: #{tpu_custom_call.1} parent=35 // pred_region
          #allocation16 [shape = 'u32[6]{0}', space=smem, size = 0x18, scoped, tag = 'DMA stride descriptor']
          %s301 = sand.u32 %s60, 1
          %s302 = scalar_lea.sflag [#allocation3], %s301
          %s303 = sand.u32 %s60, 1
          %s304 = smul.addr %s303, 48
          %s305 = scalar_lea.vmem [#allocation6], %s304
          %s306 = smul.u32 4, %s29
          %s308 = ssub.s32 768, 768
          %309 = vsyncadd %s302, %s308
          %s310 = smul.addr %s306, 64
          %s311 = scalar_lea.hbm %s1, %s310
          %s313 = sshll.u32 1, 14
          %s314 = sxor.u32 4294967295, %s313
          %s316 = sld [smem:[#allocation0]]
          %s317 = sadd.s32 2, %s316
          %s319 = sshll.u32 7, 26
          %s320 = sxor.u32 4294967295, %s319
          %s321 = sand.u32 0, %s320
          %s322 = sshll.u32 %s317, 26
          %s323 = sor.u32 %s321, %s322
          %s324 = sshll.u32 %s305, 4
          %s325 = int_to_ptr.vmem [resolvable:$true] %s324
          %331 = sst [smem:[#allocation16]] 512
          %s332 = scalar_lea.smem [#allocation16], 1
          %333 = sst [smem:[%s332]] 256
          %s334 = scalar_lea.smem [#allocation16], 2
          %335 = sst [smem:[%s334]] 4
          %s336 = scalar_lea.smem [#allocation16], 3
          %337 = sst [smem:[%s336]] 64
          %s338 = scalar_lea.smem [#allocation16], 4
          %339 = sst [smem:[%s338]] 64
          %s340 = scalar_lea.smem [#allocation16], 5
          %341 = sst [smem:[%s340]] 4
          %343 = dma.general %s311, 768, %s325, %s302, [#allocation15], [#allocation16], %s323, 0
        $region40: #{tpu_custom_call.1} parent=35 // pred_fallthru
          _
        // Predicated region
        $region41: #{tpu_custom_call.1} parent=35 // pred_check
          %p344 = pneg %p96
        $region42: #{tpu_custom_call.1} parent=35 // pred_check_branch
          %346 = sbr.rel (%p344) target = $region44
        $region43: #{tpu_custom_call.1} parent=35 // pred_region
          %s347 = sand.u32 %s29, 1
          %s348 = scalar_lea.sflag [#allocation8], %s347
          %s349 = sand.u32 %s86, 1
          %s350 = smul.addr %s349, 256
          %s351 = scalar_lea.vmem [#allocation7], %s350
          %s352 = smul.u32 4, %s29
          %s354 = ssub.s32 4096, 4096
          %355 = vsyncadd %s348, %s354
          %s356 = smul.addr %s352, 16
          %s357 = smul.addr %s356, 64
          %s358 = scalar_lea.hbm %s2, %s357
          %s359 = sshll.u32 %s351, 4
          %s360 = int_to_ptr.vmem [resolvable:$true] %s359
          %365 = dma.hbm_to_vmem [thread:$0]  %s358, 4096, %s360, %s348, 64, 64, 4
        $region44: #{tpu_custom_call.1} parent=35 // pred_fallthru
          _
      $region36: #{tpu_custom_call.1} parent=5 // pred_fallthru
        _
      %p366 = scmp.le.s32.totalorder 1, %s29
      %p367 = scmp.lt.s32.totalorder %s29, 3
      %p368 = pnand %p366, %p367
      %p369 = pneg %p368
      // Predicated region
      $region45: #{tpu_custom_call.1} parent=5 // pred_check
        _
      $region46: #{tpu_custom_call.1} parent=5 // pred_check_branch
        %371 = sbr.rel (%p368) target = $region48
      $region47: #{tpu_custom_call.1} parent=5 // pred_region
        %s372 = ssub.s32 %s29, 1
        // Predicated region
        $region49: #{tpu_custom_call.1} parent=47 // pred_check
          %p373 = pneg %p50
        $region50: #{tpu_custom_call.1} parent=47 // pred_check_branch
          %375 = sbr.rel (%p373) target = $region52
        $region51: #{tpu_custom_call.1} parent=47 // pred_region
          %376 = dma.done [#allocation5], 16
        $region52: #{tpu_custom_call.1} parent=47 // pred_fallthru
          _
        %s377 = sand.u32 %s63, 1
        %s378 = scalar_lea.sflag [#allocation3], %s377
        %s379 = sand.u32 %s63, 1
        %s380 = smul.addr %s379, 48
        %s381 = scalar_lea.vmem [#allocation6], %s380
        // Predicated region
        $region53: #{tpu_custom_call.1} parent=47 // pred_check
          %p382 = pneg %p76
        $region54: #{tpu_custom_call.1} parent=47 // pred_check_branch
          %384 = sbr.rel (%p382) target = $region56
        $region55: #{tpu_custom_call.1} parent=47 // pred_region
          %385 = dma.done %s378, 768
        $region56: #{tpu_custom_call.1} parent=47 // pred_fallthru
          _
        %s386 = sand.u32 %s34, 1
        %s387 = scalar_lea.sflag [#allocation8], %s386
        %s388 = sand.u32 %s89, 1
        %s389 = smul.addr %s388, 256
        %s390 = scalar_lea.vmem [#allocation7], %s389
        // Predicated region
        $region57: #{tpu_custom_call.1} parent=47 // pred_check
          %p391 = pneg %p102
        $region58: #{tpu_custom_call.1} parent=47 // pred_check_branch
          %393 = sbr.rel (%p391) target = $region60
        $region59: #{tpu_custom_call.1} parent=47 // pred_region
          %394 = dma.done %s387, 4096
        $region60: #{tpu_custom_call.1} parent=47 // pred_fallthru
          _
        // Predicated region
        $region61: #{tpu_custom_call.1} parent=47 // pred_check
          %p395 = pneg %p123
        $region62: #{tpu_custom_call.1} parent=47 // pred_check_branch
          %397 = sbr.rel (%p395) target = $region64
        $region63: #{tpu_custom_call.1} parent=47 // pred_region
          %398 = dma.done [#allocation8], 3072
        $region64: #{tpu_custom_call.1} parent=47 // pred_fallthru
          _
        // Predicated region
        $region65: #{tpu_custom_call.1} parent=47 // pred_check
          %p399 = pneg %p165
        $region66: #{tpu_custom_call.1} parent=47 // pred_check_branch
          %401 = sbr.rel (%p399) target = $region68
        $region67: #{tpu_custom_call.1} parent=47 // pred_region
          %402 = dma.done [#allocation11], 2048
        $region68: #{tpu_custom_call.1} parent=47 // pred_fallthru
          _
        %403 = sfence
        %p404 = pneg %p50
        %p405 = pneg %p47
        %s406 = sand.u32 %s63, 1
        %s407 = scalar_lea.sflag [#allocation3], %s406
        %s408 = sand.u32 %s63, 1
        %s409 = smul.addr %s408, 48
        %s410 = scalar_lea.vmem [#allocation6], %s409
        %p411 = pneg %p76
        %p412 = pneg %p73
        %s413 = sand.u32 %s34, 1
        %s414 = scalar_lea.sflag [#allocation8], %s413
        %s415 = sand.u32 %s89, 1
        %s416 = smul.addr %s415, 256
        %s417 = scalar_lea.vmem [#allocation7], %s416
        %p418 = pneg %p102
        %p419 = pneg %p99
        %p420 = pneg %p123
        %p421 = pneg %p120
        %p422 = pneg %p144
        %p423 = pneg %p141
        %p424 = pneg %p165
        %p425 = pneg %p162
        %p426 = pneg %p186
        %p427 = pneg %p183
        %p428 = pneg %p212
        %p429 = pneg %p209
        %s430 = sand.u32 %s199, 1
        %s431 = scalar_lea.sflag [#allocation4], %s430
        %s432 = sand.u32 %s199, 1
        %s433 = smul.addr %s432, 32
        %s434 = scalar_lea.vmem [#allocation12], %s433
        %p435 = pneg %p238
        %p436 = pneg %p235
        %s437 = sand.u32 %s225, 1
        %s438 = scalar_lea.sflag [#allocation14], %s437
        %s439 = sand.u32 %s225, 1
        %s440 = smul.addr %s439, 32
        %s441 = scalar_lea.vmem [#allocation13], %s440
        %s442 = smul.u32 4, %s34
        %s443 = smul.u32 4, %s34
        %s444 = smul.u32 4, %s34
        %s445 = smul.u32 4, %s34
        %v447 = vld [vmem:[%s390] sm:$0xf]
        %v448 = vld [vmem:[%s390 + $0x4] sm:$0xf]
        %v449 = vld [vmem:[%s390 + $0x8] sm:$0xf]
        %v450 = vld [vmem:[%s390 + $0xc] sm:$0xf]
        %v451 = vld [vmem:[%s390 + $0x10] sm:$0xf]
        %v452 = vld [vmem:[%s390 + $0x14] sm:$0xf]
        %v453 = vld [vmem:[%s390 + $0x18] sm:$0xf]
        %v454 = vld [vmem:[%s390 + $0x1c] sm:$0xf]
        %v455 = vld [vmem:[%s390 + $0x20] sm:$0xf]
        %v456 = vld [vmem:[%s390 + $0x24] sm:$0xf]
        %v457 = vld [vmem:[%s390 + $0x28] sm:$0xf]
        %v458 = vld [vmem:[%s390 + $0x2c] sm:$0xf]
        %v459 = vld [vmem:[%s390 + $0x30] sm:$0xf]
        %v460 = vld [vmem:[%s390 + $0x34] sm:$0xf]
        %v461 = vld [vmem:[%s390 + $0x38] sm:$0xf]
        %v462 = vld [vmem:[%s390 + $0x3c] sm:$0xf]
        %v463 = vld [vmem:[%s390 + $0x40] sm:$0xf]
        %v464 = vld [vmem:[%s390 + $0x44] sm:$0xf]
        %v465 = vld [vmem:[%s390 + $0x48] sm:$0xf]
        %v466 = vld [vmem:[%s390 + $0x4c] sm:$0xf]
        %v467 = vld [vmem:[%s390 + $0x50] sm:$0xf]
        %v468 = vld [vmem:[%s390 + $0x54] sm:$0xf]
        %v469 = vld [vmem:[%s390 + $0x58] sm:$0xf]
        %v470 = vld [vmem:[%s390 + $0x5c] sm:$0xf]
        %v471 = vld [vmem:[%s390 + $0x60] sm:$0xf]
        %v472 = vld [vmem:[%s390 + $0x64] sm:$0xf]
        %v473 = vld [vmem:[%s390 + $0x68] sm:$0xf]
        %v474 = vld [vmem:[%s390 + $0x6c] sm:$0xf]
        %v475 = vld [vmem:[%s390 + $0x70] sm:$0xf]
        %v476 = vld [vmem:[%s390 + $0x74] sm:$0xf]
        %v477 = vld [vmem:[%s390 + $0x78] sm:$0xf]
        %v478 = vld [vmem:[%s390 + $0x7c] sm:$0xf]
        %v479 = vld [vmem:[%s390 + $0x80] sm:$0xf]
        %v480 = vld [vmem:[%s390 + $0x84] sm:$0xf]
        %v481 = vld [vmem:[%s390 + $0x88] sm:$0xf]
        %v482 = vld [vmem:[%s390 + $0x8c] sm:$0xf]
        %v483 = vld [vmem:[%s390 + $0x90] sm:$0xf]
        %v484 = vld [vmem:[%s390 + $0x94] sm:$0xf]
        %v485 = vld [vmem:[%s390 + $0x98] sm:$0xf]
        %v486 = vld [vmem:[%s390 + $0x9c] sm:$0xf]
        %v487 = vld [vmem:[%s390 + $0xa0] sm:$0xf]
        %v488 = vld [vmem:[%s390 + $0xa4] sm:$0xf]
        %v489 = vld [vmem:[%s390 + $0xa8] sm:$0xf]
        %v490 = vld [vmem:[%s390 + $0xac] sm:$0xf]
        %v491 = vld [vmem:[%s390 + $0xb0] sm:$0xf]
        %v492 = vld [vmem:[%s390 + $0xb4] sm:$0xf]
        %v493 = vld [vmem:[%s390 + $0xb8] sm:$0xf]
        %v494 = vld [vmem:[%s390 + $0xbc] sm:$0xf]
        %v495 = vld [vmem:[%s390 + $0xc0] sm:$0xf]
        %v496 = vld [vmem:[%s390 + $0xc4] sm:$0xf]
        %v497 = vld [vmem:[%s390 + $0xc8] sm:$0xf]
        %v498 = vld [vmem:[%s390 + $0xcc] sm:$0xf]
        %v499 = vld [vmem:[%s390 + $0xd0] sm:$0xf]
        %v500 = vld [vmem:[%s390 + $0xd4] sm:$0xf]
        %v501 = vld [vmem:[%s390 + $0xd8] sm:$0xf]
        %v502 = vld [vmem:[%s390 + $0xdc] sm:$0xf]
        %v503 = vld [vmem:[%s390 + $0xe0] sm:$0xf]
        %v504 = vld [vmem:[%s390 + $0xe4] sm:$0xf]
        %v505 = vld [vmem:[%s390 + $0xe8] sm:$0xf]
        %v506 = vld [vmem:[%s390 + $0xec] sm:$0xf]
        %v507 = vld [vmem:[%s390 + $0xf0] sm:$0xf]
        %v508 = vld [vmem:[%s390 + $0xf4] sm:$0xf]
        %v509 = vld [vmem:[%s390 + $0xf8] sm:$0xf]
        %v510 = vld [vmem:[%s390 + $0xfc] sm:$0xf]
        %v511 = vld [vmem:[#allocation10] sm:$0xff]
        %v512 = vld [vmem:[#allocation10 + $0x8] sm:$0xff]
        %v513 = vld [vmem:[#allocation10 + $0x10] sm:$0xff]
        %v514 = vld [vmem:[#allocation10 + $0x18] sm:$0xff]
        %v515 = vld [vmem:[#allocation10 + $0x20] sm:$0xff]
        %v516 = vld [vmem:[#allocation10 + $0x28] sm:$0xff]
        %v517 = vld [vmem:[#allocation10 + $0x30] sm:$0xff]
        %v518 = vld [vmem:[#allocation10 + $0x38] sm:$0xff]
        %v519 = vld [vmem:[#allocation10 + $0x40] sm:$0xff]
        %v520 = vld [vmem:[#allocation10 + $0x48] sm:$0xff]
        %v521 = vld [vmem:[#allocation10 + $0x50] sm:$0xff]
        %v522 = vld [vmem:[#allocation10 + $0x58] sm:$0xff]
        %v523 = vld [vmem:[#allocation10 + $0x60] sm:$0xff]
        %v524 = vld [vmem:[#allocation10 + $0x68] sm:$0xff]
        %v525 = vld [vmem:[#allocation10 + $0x70] sm:$0xff]
        %v526 = vld [vmem:[#allocation10 + $0x78] sm:$0xff]
        %v527 = vld [vmem:[%s6] sm:$0x3]
        %v529 = vlaneseq
        %v530 = vshrl.u32 %v529, 7
        %v531 = vsub.s32 0, %v530
        %v532 = vrot.slane %v527, %v531
        %v533 = vlaneseq
        %v534 = vshrl.u32 %v533, 7
        %v535 = vsub.s32 1, %v534
        %v536 = vrot.slane %v527, %v535
        %v603 = vunpack.c.l.b16 %v447
        %v604 = vunpack.c.l.b16 %v448
        %v605 = vunpack.c.l.b16 %v449
        %v606 = vunpack.c.l.b16 %v450
        %v607 = vunpack.c.l.b16 %v451
        %v608 = vunpack.c.l.b16 %v452
        %v609 = vunpack.c.l.b16 %v453
        %v610 = vunpack.c.l.b16 %v454
        %v611 = vunpack.c.l.b16 %v455
        %v612 = vunpack.c.l.b16 %v456
        %v613 = vunpack.c.l.b16 %v457
        %v614 = vunpack.c.l.b16 %v458
        %v615 = vunpack.c.l.b16 %v459
        %v616 = vunpack.c.l.b16 %v460
        %v617 = vunpack.c.l.b16 %v461
        %v618 = vunpack.c.l.b16 %v462
        %v619 = vunpack.c.l.b16 %v463
        %v620 = vunpack.c.l.b16 %v464
        %v621 = vunpack.c.l.b16 %v465
        %v622 = vunpack.c.l.b16 %v466
        %v623 = vunpack.c.l.b16 %v467
        %v624 = vunpack.c.l.b16 %v468
        %v625 = vunpack.c.l.b16 %v469
        %v626 = vunpack.c.l.b16 %v470
        %v627 = vunpack.c.l.b16 %v471
        %v628 = vunpack.c.l.b16 %v472
        %v629 = vunpack.c.l.b16 %v473
        %v630 = vunpack.c.l.b16 %v474
        %v631 = vunpack.c.l.b16 %v475
        %v632 = vunpack.c.l.b16 %v476
        %v633 = vunpack.c.l.b16 %v477
        %v634 = vunpack.c.l.b16 %v478
        %v635 = vunpack.c.l.b16 %v479
        %v636 = vunpack.c.l.b16 %v480
        %v637 = vunpack.c.l.b16 %v481
        %v638 = vunpack.c.l.b16 %v482
        %v639 = vunpack.c.l.b16 %v483
        %v640 = vunpack.c.l.b16 %v484
        %v641 = vunpack.c.l.b16 %v485
        %v642 = vunpack.c.l.b16 %v486
        %v643 = vunpack.c.l.b16 %v487
        %v644 = vunpack.c.l.b16 %v488
        %v645 = vunpack.c.l.b16 %v489
        %v646 = vunpack.c.l.b16 %v490
        %v647 = vunpack.c.l.b16 %v491
        %v648 = vunpack.c.l.b16 %v492
        %v649 = vunpack.c.l.b16 %v493
        %v650 = vunpack.c.l.b16 %v494
        %v651 = vunpack.c.l.b16 %v495
        %v652 = vunpack.c.l.b16 %v496
        %v653 = vunpack.c.l.b16 %v497
        %v654 = vunpack.c.l.b16 %v498
        %v655 = vunpack.c.l.b16 %v499
        %v656 = vunpack.c.l.b16 %v500
        %v657 = vunpack.c.l.b16 %v501
        %v658 = vunpack.c.l.b16 %v502
        %v659 = vunpack.c.l.b16 %v503
        %v660 = vunpack.c.l.b16 %v504
        %v661 = vunpack.c.l.b16 %v505
        %v662 = vunpack.c.l.b16 %v506
        %v663 = vunpack.c.l.b16 %v507
        %v664 = vunpack.c.l.b16 %v508
        %v665 = vunpack.c.l.b16 %v509
        %v666 = vunpack.c.l.b16 %v510
        %v667 = vpack.c.b16 %v604, %v603
        %v668 = vpack.c.b16 %v606, %v605
        %v669 = vpack.c.b16 %v608, %v607
        %v670 = vpack.c.b16 %v610, %v609
        %v671 = vpack.c.b16 %v612, %v611
        %v672 = vpack.c.b16 %v614, %v613
        %v673 = vpack.c.b16 %v616, %v615
        %v674 = vpack.c.b16 %v618, %v617
        %v675 = vpack.c.b16 %v620, %v619
        %v676 = vpack.c.b16 %v622, %v621
        %v677 = vpack.c.b16 %v624, %v623
        %v678 = vpack.c.b16 %v626, %v625
        %v679 = vpack.c.b16 %v628, %v627
        %v680 = vpack.c.b16 %v630, %v629
        %v681 = vpack.c.b16 %v632, %v631
        %v682 = vpack.c.b16 %v634, %v633
        %v683 = vpack.c.b16 %v636, %v635
        %v684 = vpack.c.b16 %v638, %v637
        %v685 = vpack.c.b16 %v640, %v639
        %v686 = vpack.c.b16 %v642, %v641
        %v687 = vpack.c.b16 %v644, %v643
        %v688 = vpack.c.b16 %v646, %v645
        %v689 = vpack.c.b16 %v648, %v647
        %v690 = vpack.c.b16 %v650, %v649
        %v691 = vpack.c.b16 %v652, %v651
        %v692 = vpack.c.b16 %v654, %v653
        %v693 = vpack.c.b16 %v656, %v655
        %v694 = vpack.c.b16 %v658, %v657
        %v695 = vpack.c.b16 %v660, %v659
        %v696 = vpack.c.b16 %v662, %v661
        %v697 = vpack.c.b16 %v664, %v663
        %v698 = vpack.c.b16 %v666, %v665
        %v747 = vunpack.c.l.b16 %v511
        %v748 = vunpack.c.h.b16 %v511
        %v749 = vunpack.c.l.b16 %v512
        %v750 = vunpack.c.h.b16 %v512
        %v751 = vunpack.c.l.b16 %v513
        %v752 = vunpack.c.h.b16 %v513
        %v753 = vunpack.c.l.b16 %v514
        %v754 = vunpack.c.h.b16 %v514
        %v755 = vunpack.c.l.b16 %v515
        %v756 = vunpack.c.h.b16 %v515
        %v757 = vunpack.c.l.b16 %v516
        %v758 = vunpack.c.h.b16 %v516
        %v759 = vunpack.c.l.b16 %v517
        %v760 = vunpack.c.h.b16 %v517
        %v761 = vunpack.c.l.b16 %v518
        %v762 = vunpack.c.h.b16 %v518
        %v763 = vunpack.c.l.b16 %v519
        %v764 = vunpack.c.h.b16 %v519
        %v765 = vunpack.c.l.b16 %v520
        %v766 = vunpack.c.h.b16 %v520
        %v767 = vunpack.c.l.b16 %v521
        %v768 = vunpack.c.h.b16 %v521
        %v769 = vunpack.c.l.b16 %v522
        %v770 = vunpack.c.h.b16 %v522
        %v771 = vunpack.c.l.b16 %v523
        %v772 = vunpack.c.h.b16 %v523
        %v773 = vunpack.c.l.b16 %v524
        %v774 = vunpack.c.h.b16 %v524
        %v775 = vunpack.c.l.b16 %v525
        %v776 = vunpack.c.h.b16 %v525
        %v777 = vunpack.c.l.b16 %v526
        %v778 = vunpack.c.h.b16 %v526
        %v779 = vpack.c.b16 %v749, %v747
        %v780 = vpack.c.b16 %v750, %v748
        %v781 = vpack.c.b16 %v753, %v751
        %v782 = vpack.c.b16 %v754, %v752
        %v783 = vpack.c.b16 %v757, %v755
        %v784 = vpack.c.b16 %v758, %v756
        %v785 = vpack.c.b16 %v761, %v759
        %v786 = vpack.c.b16 %v762, %v760
        %v787 = vpack.c.b16 %v765, %v763
        %v788 = vpack.c.b16 %v766, %v764
        %v789 = vpack.c.b16 %v769, %v767
        %v790 = vpack.c.b16 %v770, %v768
        %v791 = vpack.c.b16 %v773, %v771
        %v792 = vpack.c.b16 %v774, %v772
        %v793 = vpack.c.b16 %v777, %v775
        %v794 = vpack.c.b16 %v778, %v776
        %811 = vmatprep.subr.bf16.mxu0 %v780
        %812 = vmatpush1.bf16.msra.mxu0 %v779
        %813 = vmatprep.subr.bf16.mxu0 %v782
        %814 = vmatpush1.bf16.msra.mxu0 %v781
        %815 = vmatprep.subr.bf16.mxu0 %v784
        %816 = vmatpush1.bf16.msra.mxu0 %v783
        %817 = vmatprep.subr.bf16.mxu0 %v786
        %818 = vmatpush1.bf16.msra.mxu0 %v785
        %819 = vmatprep.subr.bf16.mxu0 %v788
        %820 = vmatpush1.bf16.msra.mxu0 %v787
        %821 = vmatprep.subr.bf16.mxu0 %v790
        %822 = vmatpush1.bf16.msra.mxu0 %v789
        %823 = vmatprep.subr.bf16.mxu0 %v792
        %824 = vmatpush1.bf16.msra.mxu0 %v791
        %825 = vmatprep.subr.bf16.mxu0 %v794
        %826 = vmatpush1.bf16.msra.mxu0 %v793
        %827 = vmatprep.subr.bf16.mxu0 0
        %828 = vmatpush1.bf16.msra.mxu0 0
        %829 = vmatprep.subr.bf16.mxu0 0
        %830 = vmatpush1.bf16.msra.mxu0 0
        %831 = vmatprep.subr.bf16.mxu0 0
        %832 = vmatpush1.bf16.msra.mxu0 0
        %833 = vmatprep.subr.bf16.mxu0 0
        %834 = vmatpush1.bf16.msra.mxu0 0
        %835 = vmatprep.subr.bf16.mxu0 0
        %836 = vmatpush1.bf16.msra.mxu0 0
        %837 = vmatprep.subr.bf16.mxu0 0
        %838 = vmatpush1.bf16.msra.mxu0 0
        %839 = vmatprep.subr.bf16.mxu0 0
        %840 = vmatpush1.bf16.msra.mxu0 0
        %841 = vmatprep.subr.bf16.mxu0 0
        %842 = vmatpush1.bf16.msra.mxu0 0
        %843 = vmatprep.mubr.bf16.mxu0 0
        %844 = vmatmul.mubr.bf16.gmra.mrb[0].mxu0 %v667
        %v845 = vpop.f32.mrb[0].mxu0
        %v846 = vadd.f32 %v532, %v845
        %v847 = vpop.f32.mrb[0].mxu0
        %v848 = vadd.f32 %v536, %v847
        %v849 = vpop.f32.mrb[0].mxu0
        %v850 = vadd.f32 %v532, %v849
        %v851 = vpop.f32.mrb[0].mxu0
        %v852 = vadd.f32 %v536, %v851
        %853 = vmatprep.mubr.bf16.mxu0 0
        %854 = vmatmul.mubr.bf16.gmra.mrb[0].mxu0 %v668
        %v855 = vpop.f32.mrb[0].mxu0
        %v856 = vadd.f32 %v532, %v855
        %v857 = vpop.f32.mrb[0].mxu0
        %v858 = vadd.f32 %v536, %v857
        %v859 = vpop.f32.mrb[0].mxu0
        %v860 = vadd.f32 %v532, %v859
        %v861 = vpop.f32.mrb[0].mxu0
        %v862 = vadd.f32 %v536, %v861
        %863 = vmatprep.mubr.bf16.mxu0 0
        %864 = vmatmul.mubr.bf16.gmra.mrb[0].mxu0 %v669
        %v865 = vpop.f32.mrb[0].mxu0
        %v866 = vadd.f32 %v532, %v865
        %v867 = vpop.f32.mrb[0].mxu0
        %v868 = vadd.f32 %v536, %v867
        %v869 = vpop.f32.mrb[0].mxu0
        %v870 = vadd.f32 %v532, %v869
        %v871 = vpop.f32.mrb[0].mxu0
        %v872 = vadd.f32 %v536, %v871
        %873 = vmatprep.mubr.bf16.mxu0 0
        %874 = vmatmul.mubr.bf16.gmra.mrb[0].mxu0 %v670
        %v875 = vpop.f32.mrb[0].mxu0
        %v876 = vadd.f32 %v532, %v875
        %v877 = vpop.f32.mrb[0].mxu0
        %v878 = vadd.f32 %v536, %v877
        %v879 = vpop.f32.mrb[0].mxu0
        %v880 = vadd.f32 %v532, %v879
        %v881 = vpop.f32.mrb[0].mxu0
        %v882 = vadd.f32 %v536, %v881
        %883 = vmatprep.mubr.bf16.mxu0 0
        %884 = vmatmul.mubr.bf16.gmra.mrb[0].mxu0 %v671
        %v885 = vpop.f32.mrb[0].mxu0
        %v886 = vadd.f32 %v532, %v885
        %v887 = vpop.f32.mrb[0].mxu0
        %v888 = vadd.f32 %v536, %v887
        %v889 = vpop.f32.mrb[0].mxu0
        %v890 = vadd.f32 %v532, %v889
        %v891 = vpop.f32.mrb[0].mxu0
        %v892 = vadd.f32 %v536, %v891
        %893 = vmatprep.mubr.bf16.mxu0 0
        %894 = vmatmul.mubr.bf16.gmra.mrb[0].mxu0 %v672
        %v895 = vpop.f32.mrb[0].mxu0
        %v896 = vadd.f32 %v532, %v895
        %v897 = vpop.f32.mrb[0].mxu0
        %v898 = vadd.f32 %v536, %v897
        %v899 = vpop.f32.mrb[0].mxu0
        %v900 = vadd.f32 %v532, %v899
        %v901 = vpop.f32.mrb[0].mxu0
        %v902 = vadd.f32 %v536, %v901
        %903 = vmatprep.mubr.bf16.mxu0 0
        %904 = vmatmul.mubr.bf16.gmra.mrb[0].mxu0 %v673
        %v905 = vpop.f32.mrb[0].mxu0
        %v906 = vadd.f32 %v532, %v905
        %v907 = vpop.f32.mrb[0].mxu0
        %v908 = vadd.f32 %v536, %v907
        %v909 = vpop.f32.mrb[0].mxu0
        %v910 = vadd.f32 %v532, %v909
        %v911 = vpop.f32.mrb[0].mxu0
        %v912 = vadd.f32 %v536, %v911
        %913 = vmatprep.mubr.bf16.mxu0 0
        %914 = vmatmul.mubr.bf16.gmra.mrb[0].mxu0 %v674
        %v915 = vpop.f32.mrb[0].mxu0
        %v916 = vadd.f32 %v532, %v915
        %v917 = vpop.f32.mrb[0].mxu0
        %v918 = vadd.f32 %v536, %v917
        %v919 = vpop.f32.mrb[0].mxu0
        %v920 = vadd.f32 %v532, %v919
        %v921 = vpop.f32.mrb[0].mxu0
        %v922 = vadd.f32 %v536, %v921
        %923 = vmatprep.mubr.bf16.mxu0 0
        %924 = vmatmul.mubr.bf16.gmra.mrb[0].mxu0 %v675
        %v925 = vpop.f32.mrb[0].mxu0
        %v926 = vadd.f32 %v532, %v925
        %v927 = vpop.f32.mrb[0].mxu0
        %v928 = vadd.f32 %v536, %v927
        %v929 = vpop.f32.mrb[0].mxu0
        %v930 = vadd.f32 %v532, %v929
        %v931 = vpop.f32.mrb[0].mxu0
        %v932 = vadd.f32 %v536, %v931
        %933 = vmatprep.mubr.bf16.mxu0 0
        %934 = vmatmul.mubr.bf16.gmra.mrb[0].mxu0 %v676
        %v935 = vpop.f32.mrb[0].mxu0
        %v936 = vadd.f32 %v532, %v935
        %v937 = vpop.f32.mrb[0].mxu0
        %v938 = vadd.f32 %v536, %v937
        %v939 = vpop.f32.mrb[0].mxu0
        %v940 = vadd.f32 %v532, %v939
        %v941 = vpop.f32.mrb[0].mxu0
        %v942 = vadd.f32 %v536, %v941
        %943 = vmatprep.mubr.bf16.mxu0 0
        %944 = vmatmul.mubr.bf16.gmra.mrb[0].mxu0 %v677
        %v945 = vpop.f32.mrb[0].mxu0
        %v946 = vadd.f32 %v532, %v945
        %v947 = vpop.f32.mrb[0].mxu0
        %v948 = vadd.f32 %v536, %v947
        %v949 = vpop.f32.mrb[0].mxu0
        %v950 = vadd.f32 %v532, %v949
        %v951 = vpop.f32.mrb[0].mxu0
        %v952 = vadd.f32 %v536, %v951
        %953 = vmatprep.mubr.bf16.mxu0 0
        %954 = vmatmul.mubr.bf16.gmra.mrb[0].mxu0 %v678
        %v955 = vpop.f32.mrb[0].mxu0
        %v956 = vadd.f32 %v532, %v955
        %v957 = vpop.f32.mrb[0].mxu0
        %v958 = vadd.f32 %v536, %v957
        %v959 = vpop.f32.mrb[0].mxu0
        %v960 = vadd.f32 %v532, %v959
        %v961 = vpop.f32.mrb[0].mxu0
        %v962 = vadd.f32 %v536, %v961
        %963 = vmatprep.mubr.bf16.mxu0 0
        %964 = vmatmul.mubr.bf16.gmra.mrb[0].mxu0 %v679
        %v965 = vpop.f32.mrb[0].mxu0
        %v966 = vadd.f32 %v532, %v965
        %v967 = vpop.f32.mrb[0].mxu0
        %v968 = vadd.f32 %v536, %v967
        %v969 = vpop.f32.mrb[0].mxu0
        %v970 = vadd.f32 %v532, %v969
        %v971 = vpop.f32.mrb[0].mxu0
        %v972 = vadd.f32 %v536, %v971
        %973 = vmatprep.mubr.bf16.mxu0 0
        %974 = vmatmul.mubr.bf16.gmra.mrb[0].mxu0 %v680
        %v975 = vpop.f32.mrb[0].mxu0
        %v976 = vadd.f32 %v532, %v975
        %v977 = vpop.f32.mrb[0].mxu0
        %v978 = vadd.f32 %v536, %v977
        %v979 = vpop.f32.mrb[0].mxu0
        %v980 = vadd.f32 %v532, %v979
        %v981 = vpop.f32.mrb[0].mxu0
        %v982 = vadd.f32 %v536, %v981
        %983 = vmatprep.mubr.bf16.mxu0 0
        %984 = vmatmul.mubr.bf16.gmra.mrb[0].mxu0 %v681
        %v985 = vpop.f32.mrb[0].mxu0
        %v986 = vadd.f32 %v532, %v985
        %v987 = vpop.f32.mrb[0].mxu0
        %v988 = vadd.f32 %v536, %v987
        %v989 = vpop.f32.mrb[0].mxu0
        %v990 = vadd.f32 %v532, %v989
        %v991 = vpop.f32.mrb[0].mxu0
        %v992 = vadd.f32 %v536, %v991
        %993 = vmatprep.mubr.bf16.mxu0 0
        %994 = vmatmul.mubr.bf16.gmra.mrb[0].mxu0 %v682
        %v995 = vpop.f32.mrb[0].mxu0
        %v996 = vadd.f32 %v532, %v995
        %v997 = vpop.f32.mrb[0].mxu0
        %v998 = vadd.f32 %v536, %v997
        %v999 = vpop.f32.mrb[0].mxu0
        %v1000 = vadd.f32 %v532, %v999
        %v1001 = vpop.f32.mrb[0].mxu0
        %v1002 = vadd.f32 %v536, %v1001
        %1003 = vmatprep.mubr.bf16.mxu0 0
        %1004 = vmatmul.mubr.bf16.gmra.mrb[0].mxu0 %v683
        %v1005 = vpop.f32.mrb[0].mxu0
        %v1006 = vadd.f32 %v532, %v1005
        %v1007 = vpop.f32.mrb[0].mxu0
        %v1008 = vadd.f32 %v536, %v1007
        %v1009 = vpop.f32.mrb[0].mxu0
        %v1010 = vadd.f32 %v532, %v1009
        %v1011 = vpop.f32.mrb[0].mxu0
        %v1012 = vadd.f32 %v536, %v1011
        %1013 = vmatprep.mubr.bf16.mxu0 0
        %1014 = vmatmul.mubr.bf16.gmra.mrb[0].mxu0 %v684
        %v1015 = vpop.f32.mrb[0].mxu0
        %v1016 = vadd.f32 %v532, %v1015
        %v1017 = vpop.f32.mrb[0].mxu0
        %v1018 = vadd.f32 %v536, %v1017
        %v1019 = vpop.f32.mrb[0].mxu0
        %v1020 = vadd.f32 %v532, %v1019
        %v1021 = vpop.f32.mrb[0].mxu0
        %v1022 = vadd.f32 %v536, %v1021
        %1023 = vmatprep.mubr.bf16.mxu0 0
        %1024 = vmatmul.mubr.bf16.gmra.mrb[0].mxu0 %v685
        %v1025 = vpop.f32.mrb[0].mxu0
        %v1026 = vadd.f32 %v532, %v1025
        %v1027 = vpop.f32.mrb[0].mxu0
        %v1028 = vadd.f32 %v536, %v1027
        %v1029 = vpop.f32.mrb[0].mxu0
        %v1030 = vadd.f32 %v532, %v1029
        %v1031 = vpop.f32.mrb[0].mxu0
        %v1032 = vadd.f32 %v536, %v1031
        %1033 = vmatprep.mubr.bf16.mxu0 0
        %1034 = vmatmul.mubr.bf16.gmra.mrb[0].mxu0 %v686
        %v1035 = vpop.f32.mrb[0].mxu0
        %v1036 = vadd.f32 %v532, %v1035
        %v1037 = vpop.f32.mrb[0].mxu0
        %v1038 = vadd.f32 %v536, %v1037
        %v1039 = vpop.f32.mrb[0].mxu0
        %v1040 = vadd.f32 %v532, %v1039
        %v1041 = vpop.f32.mrb[0].mxu0
        %v1042 = vadd.f32 %v536, %v1041
        %1043 = vmatprep.mubr.bf16.mxu0 0
        %1044 = vmatmul.mubr.bf16.gmra.mrb[0].mxu0 %v687
        %v1045 = vpop.f32.mrb[0].mxu0
        %v1046 = vadd.f32 %v532, %v1045
        %v1047 = vpop.f32.mrb[0].mxu0
        %v1048 = vadd.f32 %v536, %v1047
        %v1049 = vpop.f32.mrb[0].mxu0
        %v1050 = vadd.f32 %v532, %v1049
        %v1051 = vpop.f32.mrb[0].mxu0
        %v1052 = vadd.f32 %v536, %v1051
        %1053 = vmatprep.mubr.bf16.mxu0 0
        %1054 = vmatmul.mubr.bf16.gmra.mrb[0].mxu0 %v688
        %v1055 = vpop.f32.mrb[0].mxu0
        %v1056 = vadd.f32 %v532, %v1055
        %v1057 = vpop.f32.mrb[0].mxu0
        %v1058 = vadd.f32 %v536, %v1057
        %v1059 = vpop.f32.mrb[0].mxu0
        %v1060 = vadd.f32 %v532, %v1059
        %v1061 = vpop.f32.mrb[0].mxu0
        %v1062 = vadd.f32 %v536, %v1061
        %1063 = vmatprep.mubr.bf16.mxu0 0
        %1064 = vmatmul.mubr.bf16.gmra.mrb[0].mxu0 %v689
        %v1065 = vpop.f32.mrb[0].mxu0
        %v1066 = vadd.f32 %v532, %v1065
        %v1067 = vpop.f32.mrb[0].mxu0
        %v1068 = vadd.f32 %v536, %v1067
        %v1069 = vpop.f32.mrb[0].mxu0
        %v1070 = vadd.f32 %v532, %v1069
        %v1071 = vpop.f32.mrb[0].mxu0
        %v1072 = vadd.f32 %v536, %v1071
        %1073 = vmatprep.mubr.bf16.mxu0 0
        %1074 = vmatmul.mubr.bf16.gmra.mrb[0].mxu0 %v690
        %v1075 = vpop.f32.mrb[0].mxu0
        %v1076 = vadd.f32 %v532, %v1075
        %v1077 = vpop.f32.mrb[0].mxu0
        %v1078 = vadd.f32 %v536, %v1077
        %v1079 = vpop.f32.mrb[0].mxu0
        %v1080 = vadd.f32 %v532, %v1079
        %v1081 = vpop.f32.mrb[0].mxu0
        %v1082 = vadd.f32 %v536, %v1081
        %1083 = vmatprep.mubr.bf16.mxu0 0
        %1084 = vmatmul.mubr.bf16.gmra.mrb[0].mxu0 %v691
        %v1085 = vpop.f32.mrb[0].mxu0
        %v1086 = vadd.f32 %v532, %v1085
        %v1087 = vpop.f32.mrb[0].mxu0
        %v1088 = vadd.f32 %v536, %v1087
        %v1089 = vpop.f32.mrb[0].mxu0
        %v1090 = vadd.f32 %v532, %v1089
        %v1091 = vpop.f32.mrb[0].mxu0
        %v1092 = vadd.f32 %v536, %v1091
        %1093 = vmatprep.mubr.bf16.mxu0 0
        %1094 = vmatmul.mubr.bf16.gmra.mrb[0].mxu0 %v692
        %v1095 = vpop.f32.mrb[0].mxu0
        %v1096 = vadd.f32 %v532, %v1095
        %v1097 = vpop.f32.mrb[0].mxu0
        %v1098 = vadd.f32 %v536, %v1097
        %v1099 = vpop.f32.mrb[0].mxu0
        %v1100 = vadd.f32 %v532, %v1099
        %v1101 = vpop.f32.mrb[0].mxu0
        %v1102 = vadd.f32 %v536, %v1101
        %1103 = vmatprep.mubr.bf16.mxu0 0
        %1104 = vmatmul.mubr.bf16.gmra.mrb[0].mxu0 %v693
        %v1105 = vpop.f32.mrb[0].mxu0
        %v1106 = vadd.f32 %v532, %v1105
        %v1107 = vpop.f32.mrb[0].mxu0
        %v1108 = vadd.f32 %v536, %v1107
        %v1109 = vpop.f32.mrb[0].mxu0
        %v1110 = vadd.f32 %v532, %v1109
        %v1111 = vpop.f32.mrb[0].mxu0
        %v1112 = vadd.f32 %v536, %v1111
        %1113 = vmatprep.mubr.bf16.mxu0 0
        %1114 = vmatmul.mubr.bf16.gmra.mrb[0].mxu0 %v694
        %v1115 = vpop.f32.mrb[0].mxu0
        %v1116 = vadd.f32 %v532, %v1115
        %v1117 = vpop.f32.mrb[0].mxu0
        %v1118 = vadd.f32 %v536, %v1117
        %v1119 = vpop.f32.mrb[0].mxu0
        %v1120 = vadd.f32 %v532, %v1119
        %v1121 = vpop.f32.mrb[0].mxu0
        %v1122 = vadd.f32 %v536, %v1121
        %1123 = vmatprep.mubr.bf16.mxu0 0
        %1124 = vmatmul.mubr.bf16.gmra.mrb[0].mxu0 %v695
        %v1125 = vpop.f32.mrb[0].mxu0
        %v1126 = vadd.f32 %v532, %v1125
        %v1127 = vpop.f32.mrb[0].mxu0
        %v1128 = vadd.f32 %v536, %v1127
        %v1129 = vpop.f32.mrb[0].mxu0
        %v1130 = vadd.f32 %v532, %v1129
        %v1131 = vpop.f32.mrb[0].mxu0
        %v1132 = vadd.f32 %v536, %v1131
        %1133 = vmatprep.mubr.bf16.mxu0 0
        %1134 = vmatmul.mubr.bf16.gmra.mrb[0].mxu0 %v696
        %v1135 = vpop.f32.mrb[0].mxu0
        %v1136 = vadd.f32 %v532, %v1135
        %v1137 = vpop.f32.mrb[0].mxu0
        %v1138 = vadd.f32 %v536, %v1137
        %v1139 = vpop.f32.mrb[0].mxu0
        %v1140 = vadd.f32 %v532, %v1139
        %v1141 = vpop.f32.mrb[0].mxu0
        %v1142 = vadd.f32 %v536, %v1141
        %1143 = vmatprep.mubr.bf16.mxu0 0
        %1144 = vmatmul.mubr.bf16.gmra.mrb[0].mxu0 %v697
        %v1145 = vpop.f32.mrb[0].mxu0
        %v1146 = vadd.f32 %v532, %v1145
        %v1147 = vpop.f32.mrb[0].mxu0
        %v1148 = vadd.f32 %v536, %v1147
        %v1149 = vpop.f32.mrb[0].mxu0
        %v1150 = vadd.f32 %v532, %v1149
        %v1151 = vpop.f32.mrb[0].mxu0
        %v1152 = vadd.f32 %v536, %v1151
        %1153 = vmatprep.mubr.bf16.mxu0 0
        %1154 = vmatmul.mubr.bf16.gmra.mrb[0].mxu0 %v698
        %v1155 = vpop.f32.mrb[0].mxu0
        %v1156 = vadd.f32 %v532, %v1155
        %v1157 = vpop.f32.mrb[0].mxu0
        %v1158 = vadd.f32 %v536, %v1157
        %v1159 = vpop.f32.mrb[0].mxu0
        %v1160 = vadd.f32 %v532, %v1159
        %v1161 = vpop.f32.mrb[0].mxu0
        %v1162 = vadd.f32 %v536, %v1161
        %1163 = vdwg.mxu0
        %v1164 = vpack.c.bf16 %v852, %v848
        %v1165 = vpack.c.bf16 %v862, %v858
        %v1166 = vpack.c.bf16 %v872, %v868
        %v1167 = vpack.c.bf16 %v882, %v878
        %v1168 = vpack.c.bf16 %v892, %v888
        %v1169 = vpack.c.bf16 %v902, %v898
        %v1170 = vpack.c.bf16 %v912, %v908
        %v1171 = vpack.c.bf16 %v922, %v918
        %v1172 = vpack.c.bf16 %v932, %v928
        %v1173 = vpack.c.bf16 %v942, %v938
        %v1174 = vpack.c.bf16 %v952, %v948
        %v1175 = vpack.c.bf16 %v962, %v958
        %v1176 = vpack.c.bf16 %v972, %v968
        %v1177 = vpack.c.bf16 %v982, %v978
        %v1178 = vpack.c.bf16 %v992, %v988
        %v1179 = vpack.c.bf16 %v1002, %v998
        %v1180 = vpack.c.bf16 %v1012, %v1008
        %v1181 = vpack.c.bf16 %v1022, %v1018
        %v1182 = vpack.c.bf16 %v1032, %v1028
        %v1183 = vpack.c.bf16 %v1042, %v1038
        %v1184 = vpack.c.bf16 %v1052, %v1048
        %v1185 = vpack.c.bf16 %v1062, %v1058
        %v1186 = vpack.c.bf16 %v1072, %v1068
        %v1187 = vpack.c.bf16 %v1082, %v1078
        %v1188 = vpack.c.bf16 %v1092, %v1088
        %v1189 = vpack.c.bf16 %v1102, %v1098
        %v1190 = vpack.c.bf16 %v1112, %v1108
        %v1191 = vpack.c.bf16 %v1122, %v1118
        %v1192 = vpack.c.bf16 %v1132, %v1128
        %v1193 = vpack.c.bf16 %v1142, %v1138
        %v1194 = vpack.c.bf16 %v1152, %v1148
        %v1195 = vpack.c.bf16 %v1162, %v1158
        %1196 = vxpose.xlu0.b32.start [1/16] %v846, 128
        %1197 = vxpose.xlu0.b32.cont [2/16] %v850, 128
        %1198 = vxpose.xlu0.b32.cont [3/16] %v856, 128
        %1199 = vxpose.xlu0.b32.cont [4/16] %v860, 128
        %1200 = vxpose.xlu0.b32.cont [5/16] %v866, 128
        %1201 = vxpose.xlu0.b32.cont [6/16] %v870, 128
        %1202 = vxpose.xlu0.b32.cont [7/16] %v876, 128
        %1203 = vxpose.xlu0.b32.cont [8/16] %v880, 128
        %1204 = vxpose.xlu0.b32.cont [9/16] %v886, 128
        %1205 = vxpose.xlu0.b32.cont [10/16] %v890, 128
        %1206 = vxpose.xlu0.b32.cont [11/16] %v896, 128
        %1207 = vxpose.xlu0.b32.cont [12/16] %v900, 128
        %1208 = vxpose.xlu0.b32.cont [13/16] %v906, 128
        %1209 = vxpose.xlu0.b32.cont [14/16] %v910, 128
        %1210 = vxpose.xlu0.b32.cont [15/16] %v916, 128
        %1211 = vxpose.xlu0.b32.end [16/16] %v920, 128
        %v1212 = vpop.trf.xlu0
        %v1213 = vpop.trf.xlu0
        %v1214 = vpop.trf.xlu0
        %v1215 = vpop.trf.xlu0
        %v1216 = vpop.trf.xlu0
        %v1217 = vpop.trf.xlu0
        %v1218 = vpop.trf.xlu0
        %v1219 = vpop.trf.xlu0
        %v1220 = vpop.trf.xlu0
        %v1221 = vpop.trf.xlu0
        %v1222 = vpop.trf.xlu0
        %v1223 = vpop.trf.xlu0
        %v1224 = vpop.trf.xlu0
        %v1225 = vpop.trf.xlu0
        %v1226 = vpop.trf.xlu0
        %v1227 = vpop.trf.xlu0
        %1228 = vxpose.xlu0.b32.start [1/16] %v926, 128
        %1229 = vxpose.xlu0.b32.cont [2/16] %v930, 128
        %1230 = vxpose.xlu0.b32.cont [3/16] %v936, 128
        %1231 = vxpose.xlu0.b32.cont [4/16] %v940, 128
        %1232 = vxpose.xlu0.b32.cont [5/16] %v946, 128
        %1233 = vxpose.xlu0.b32.cont [6/16] %v950, 128
        %1234 = vxpose.xlu0.b32.cont [7/16] %v956, 128
        %1235 = vxpose.xlu0.b32.cont [8/16] %v960, 128
        %1236 = vxpose.xlu0.b32.cont [9/16] %v966, 128
        %1237 = vxpose.xlu0.b32.cont [10/16] %v970, 128
        %1238 = vxpose.xlu0.b32.cont [11/16] %v976, 128
        %1239 = vxpose.xlu0.b32.cont [12/16] %v980, 128
        %1240 = vxpose.xlu0.b32.cont [13/16] %v986, 128
        %1241 = vxpose.xlu0.b32.cont [14/16] %v990, 128
        %1242 = vxpose.xlu0.b32.cont [15/16] %v996, 128
        %1243 = vxpose.xlu0.b32.end [16/16] %v1000, 128
        %v1244 = vpop.trf.xlu0
        %v1245 = vpop.trf.xlu0
        %v1246 = vpop.trf.xlu0
        %v1247 = vpop.trf.xlu0
        %v1248 = vpop.trf.xlu0
        %v1249 = vpop.trf.xlu0
        %v1250 = vpop.trf.xlu0
        %v1251 = vpop.trf.xlu0
        %v1252 = vpop.trf.xlu0
        %v1253 = vpop.trf.xlu0
        %v1254 = vpop.trf.xlu0
        %v1255 = vpop.trf.xlu0
        %v1256 = vpop.trf.xlu0
        %v1257 = vpop.trf.xlu0
        %v1258 = vpop.trf.xlu0
        %v1259 = vpop.trf.xlu0
        %1260 = vxpose.xlu0.b32.start [1/16] %v1006, 128
        %1261 = vxpose.xlu0.b32.cont [2/16] %v1010, 128
        %1262 = vxpose.xlu0.b32.cont [3/16] %v1016, 128
        %1263 = vxpose.xlu0.b32.cont [4/16] %v1020, 128
        %1264 = vxpose.xlu0.b32.cont [5/16] %v1026, 128
        %1265 = vxpose.xlu0.b32.cont [6/16] %v1030, 128
        %1266 = vxpose.xlu0.b32.cont [7/16] %v1036, 128
        %1267 = vxpose.xlu0.b32.cont [8/16] %v1040, 128
        %1268 = vxpose.xlu0.b32.cont [9/16] %v1046, 128
        %1269 = vxpose.xlu0.b32.cont [10/16] %v1050, 128
        %1270 = vxpose.xlu0.b32.cont [11/16] %v1056, 128
        %1271 = vxpose.xlu0.b32.cont [12/16] %v1060, 128
        %1272 = vxpose.xlu0.b32.cont [13/16] %v1066, 128
        %1273 = vxpose.xlu0.b32.cont [14/16] %v1070, 128
        %1274 = vxpose.xlu0.b32.cont [15/16] %v1076, 128
        %1275 = vxpose.xlu0.b32.end [16/16] %v1080, 128
        %v1276 = vpop.trf.xlu0
        %v1277 = vpop.trf.xlu0
        %v1278 = vpop.trf.xlu0
        %v1279 = vpop.trf.xlu0
        %v1280 = vpop.trf.xlu0
        %v1281 = vpop.trf.xlu0
        %v1282 = vpop.trf.xlu0
        %v1283 = vpop.trf.xlu0
        %v1284 = vpop.trf.xlu0
        %v1285 = vpop.trf.xlu0
        %v1286 = vpop.trf.xlu0
        %v1287 = vpop.trf.xlu0
        %v1288 = vpop.trf.xlu0
        %v1289 = vpop.trf.xlu0
        %v1290 = vpop.trf.xlu0
        %v1291 = vpop.trf.xlu0
        %1292 = vxpose.xlu0.b32.start [1/16] %v1086, 128
        %1293 = vxpose.xlu0.b32.cont [2/16] %v1090, 128
        %1294 = vxpose.xlu0.b32.cont [3/16] %v1096, 128
        %1295 = vxpose.xlu0.b32.cont [4/16] %v1100, 128
        %1296 = vxpose.xlu0.b32.cont [5/16] %v1106, 128
        %1297 = vxpose.xlu0.b32.cont [6/16] %v1110, 128
        %1298 = vxpose.xlu0.b32.cont [7/16] %v1116, 128
        %1299 = vxpose.xlu0.b32.cont [8/16] %v1120, 128
        %1300 = vxpose.xlu0.b32.cont [9/16] %v1126, 128
        %1301 = vxpose.xlu0.b32.cont [10/16] %v1130, 128
        %1302 = vxpose.xlu0.b32.cont [11/16] %v1136, 128
        %1303 = vxpose.xlu0.b32.cont [12/16] %v1140, 128
        %1304 = vxpose.xlu0.b32.cont [13/16] %v1146, 128
        %1305 = vxpose.xlu0.b32.cont [14/16] %v1150, 128
        %1306 = vxpose.xlu0.b32.cont [15/16] %v1156, 128
        %1307 = vxpose.xlu0.b32.end [16/16] %v1160, 128
        %v1308 = vpop.trf.xlu0
        %v1309 = vpop.trf.xlu0
        %v1310 = vpop.trf.xlu0
        %v1311 = vpop.trf.xlu0
        %v1312 = vpop.trf.xlu0
        %v1313 = vpop.trf.xlu0
        %v1314 = vpop.trf.xlu0
        %v1315 = vpop.trf.xlu0
        %v1316 = vpop.trf.xlu0
        %v1317 = vpop.trf.xlu0
        %v1318 = vpop.trf.xlu0
        %v1319 = vpop.trf.xlu0
        %v1320 = vpop.trf.xlu0
        %v1321 = vpop.trf.xlu0
        %v1322 = vpop.trf.xlu0
        %v1323 = vpop.trf.xlu0
        %v1324 = vpack.c.bf16 %v1213, %v1212
        %v1325 = vpack.c.bf16 %v1215, %v1214
        %v1326 = vpack.c.bf16 %v1217, %v1216
        %v1327 = vpack.c.bf16 %v1219, %v1218
        %v1328 = vpack.c.bf16 %v1221, %v1220
        %v1329 = vpack.c.bf16 %v1223, %v1222
        %v1330 = vpack.c.bf16 %v1225, %v1224
        %v1331 = vpack.c.bf16 %v1227, %v1226
        %v1332 = vpack.c.bf16 %v1245, %v1244
        %v1333 = vpack.c.bf16 %v1247, %v1246
        %v1334 = vpack.c.bf16 %v1249, %v1248
        %v1335 = vpack.c.bf16 %v1251, %v1250
        %v1336 = vpack.c.bf16 %v1253, %v1252
        %v1337 = vpack.c.bf16 %v1255, %v1254
        %v1338 = vpack.c.bf16 %v1257, %v1256
        %v1339 = vpack.c.bf16 %v1259, %v1258
        %v1340 = vpack.c.bf16 %v1277, %v1276
        %v1341 = vpack.c.bf16 %v1279, %v1278
        %v1342 = vpack.c.bf16 %v1281, %v1280
        %v1343 = vpack.c.bf16 %v1283, %v1282
        %v1344 = vpack.c.bf16 %v1285, %v1284
        %v1345 = vpack.c.bf16 %v1287, %v1286
        %v1346 = vpack.c.bf16 %v1289, %v1288
        %v1347 = vpack.c.bf16 %v1291, %v1290
        %v1348 = vpack.c.bf16 %v1309, %v1308
        %v1349 = vpack.c.bf16 %v1311, %v1310
        %v1350 = vpack.c.bf16 %v1313, %v1312
        %v1351 = vpack.c.bf16 %v1315, %v1314
        %v1352 = vpack.c.bf16 %v1317, %v1316
        %v1353 = vpack.c.bf16 %v1319, %v1318
        %v1354 = vpack.c.bf16 %v1321, %v1320
        %v1355 = vpack.c.bf16 %v1323, %v1322
        %v1356 = vld [vmem:[%s381] sm:$0xf]
        %v1357 = vld [vmem:[%s381 + $0x4] sm:$0xf]
        %v1358 = vld [vmem:[%s381 + $0x8] sm:$0xf]
        %v1359 = vld [vmem:[%s381 + $0xc] sm:$0xf]
        %v1360 = vld [vmem:[#allocation9] sm:$0xf]
        %v1361 = vld [vmem:[#allocation9 + $0x4] sm:$0xf]
        %v1362 = vld [vmem:[#allocation9 + $0x8] sm:$0xf]
        %v1363 = vld [vmem:[#allocation9 + $0xc] sm:$0xf]
        %v1364 = vld [vmem:[#allocation9 + $0x10] sm:$0xf]
        %v1365 = vld [vmem:[#allocation9 + $0x14] sm:$0xf]
        %v1366 = vld [vmem:[#allocation9 + $0x18] sm:$0xf]
        %v1367 = vld [vmem:[#allocation9 + $0x1c] sm:$0xf]
        %v1368 = vld [vmem:[#allocation9 + $0x20] sm:$0xf]
        %v1369 = vld [vmem:[#allocation9 + $0x24] sm:$0xf]
        %v1370 = vld [vmem:[#allocation9 + $0x28] sm:$0xf]
        %v1371 = vld [vmem:[#allocation9 + $0x2c] sm:$0xf]
        %v1372 = vld [vmem:[#allocation9 + $0x30] sm:$0xf]
        %v1373 = vld [vmem:[#allocation9 + $0x34] sm:$0xf]
        %v1374 = vld [vmem:[#allocation9 + $0x38] sm:$0xf]
        %v1375 = vld [vmem:[#allocation9 + $0x3c] sm:$0xf]
        %v1376 = vld [vmem:[%s4] sm:$0x1]
        %v1378 = vlaneseq
        %v1379 = vshrl.u32 %v1378, 7
        %v1380 = vsub.s32 0, %v1379
        %v1381 = vrot.slane %v1376, %v1380
        %v1387 = vunpack.c.l.b16 %v1356
        %v1388 = vunpack.c.l.b16 %v1357
        %v1389 = vunpack.c.l.b16 %v1358
        %v1390 = vunpack.c.l.b16 %v1359
        %v1391 = vpack.c.b16 %v1388, %v1387
        %v1392 = vpack.c.b16 %v1390, %v1389
        %v1411 = vunpack.c.l.b16 %v1360
        %v1412 = vunpack.c.l.b16 %v1361
        %v1413 = vunpack.c.l.b16 %v1362
        %v1414 = vunpack.c.l.b16 %v1363
        %v1415 = vunpack.c.l.b16 %v1364
        %v1416 = vunpack.c.l.b16 %v1365
        %v1417 = vunpack.c.l.b16 %v1366
        %v1418 = vunpack.c.l.b16 %v1367
        %v1419 = vunpack.c.l.b16 %v1368
        %v1420 = vunpack.c.l.b16 %v1369
        %v1421 = vunpack.c.l.b16 %v1370
        %v1422 = vunpack.c.l.b16 %v1371
        %v1423 = vunpack.c.l.b16 %v1372
        %v1424 = vunpack.c.l.b16 %v1373
        %v1425 = vunpack.c.l.b16 %v1374
        %v1426 = vunpack.c.l.b16 %v1375
        %v1427 = vpack.c.b16 %v1412, %v1411
        %v1428 = vpack.c.b16 %v1414, %v1413
        %v1429 = vpack.c.b16 %v1416, %v1415
        %v1430 = vpack.c.b16 %v1418, %v1417
        %v1431 = vpack.c.b16 %v1420, %v1419
        %v1432 = vpack.c.b16 %v1422, %v1421
        %v1433 = vpack.c.b16 %v1424, %v1423
        %v1434 = vpack.c.b16 %v1426, %v1425
        %1443 = vmatprep.subr.bf16.mxu0 0
        %1444 = vmatpush1.bf16.msra.mxu0 %v1427
        %1445 = vmatprep.subr.bf16.mxu0 0
        %1446 = vmatpush1.bf16.msra.mxu0 %v1428
        %1447 = vmatprep.subr.bf16.mxu0 0
        %1448 = vmatpush1.bf16.msra.mxu0 %v1429
        %1449 = vmatprep.subr.bf16.mxu0 0
        %1450 = vmatpush1.bf16.msra.mxu0 %v1430
        %1451 = vmatprep.subr.bf16.mxu0 0
        %1452 = vmatpush1.bf16.msra.mxu0 %v1431
        %1453 = vmatprep.subr.bf16.mxu0 0
        %1454 = vmatpush1.bf16.msra.mxu0 %v1432
        %1455 = vmatprep.subr.bf16.mxu0 0
        %1456 = vmatpush1.bf16.msra.mxu0 %v1433
        %1457 = vmatprep.subr.bf16.mxu0 0
        %1458 = vmatpush1.bf16.msra.mxu0 %v1434
        %1459 = vmatprep.subr.bf16.mxu0 0
        %1460 = vmatpush1.bf16.msra.mxu0 0
        %1461 = vmatprep.subr.bf16.mxu0 0
        %1462 = vmatpush1.bf16.msra.mxu0 0
        %1463 = vmatprep.subr.bf16.mxu0 0
        %1464 = vmatpush1.bf16.msra.mxu0 0
        %1465 = vmatprep.subr.bf16.mxu0 0
        %1466 = vmatpush1.bf16.msra.mxu0 0
        %1467 = vmatprep.subr.bf16.mxu0 0
        %1468 = vmatpush1.bf16.msra.mxu0 0
        %1469 = vmatprep.subr.bf16.mxu0 0
        %1470 = vmatpush1.bf16.msra.mxu0 0
        %1471 = vmatprep.subr.bf16.mxu0 0
        %1472 = vmatpush1.bf16.msra.mxu0 0
        %1473 = vmatprep.subr.bf16.mxu0 0
        %1474 = vmatpush1.bf16.msra.mxu0 0
        %1475 = vmatprep.mubr.bf16.mxu0 0
        %1476 = vmatmul.mubr.bf16.gmra.mrb[0].mxu0 %v1391
        %v1477 = vpop.f32.mrb[0].mxu0
        %v1478 = vadd.f32 %v1381, %v1477
        %v1479 = vpop.f32.mrb[0].mxu0
        %v1480 = vpop.f32.mrb[0].mxu0
        %v1481 = vadd.f32 %v1381, %v1480
        %v1482 = vpop.f32.mrb[0].mxu0
        %1483 = vmatprep.mubr.bf16.mxu0 0
        %1484 = vmatmul.mubr.bf16.gmra.mrb[0].mxu0 %v1392
        %v1485 = vpop.f32.mrb[0].mxu0
        %v1486 = vadd.f32 %v1381, %v1485
        %v1487 = vpop.f32.mrb[0].mxu0
        %v1488 = vpop.f32.mrb[0].mxu0
        %v1489 = vadd.f32 %v1381, %v1488
        %v1490 = vpop.f32.mrb[0].mxu0
        %1491 = vdwg.mxu0
        %v1492 = vpack.c.bf16 %v1481, %v1478
        %v1493 = vpack.c.bf16 %v1489, %v1486
        %v1496 = vunpack.c.l.b16 %v1492
        %v1497 = vunpack.c.h.b16 %v1492
        %v1498 = vunpack.c.l.b16 %v1493
        %v1499 = vunpack.c.h.b16 %v1493
        %v1500 = vpack.c.b16 %v1496, %v1496
        %v1501 = vpack.c.b16 %v1497, %v1497
        %v1502 = vpack.c.b16 %v1498, %v1498
        %v1503 = vpack.c.b16 %v1499, %v1499
        %1508 = vmatprep.subr.bf16.mxu0 0
        %1509 = vmatpush1.bf16.msra.mxu0 %v1324
        %1510 = vmatprep.subr.bf16.mxu0 0
        %1511 = vmatpush1.bf16.msra.mxu0 %v1325
        %1512 = vmatprep.subr.bf16.mxu0 0
        %1513 = vmatpush1.bf16.msra.mxu0 %v1326
        %1514 = vmatprep.subr.bf16.mxu0 0
        %1515 = vmatpush1.bf16.msra.mxu0 %v1327
        %1516 = vmatprep.subr.bf16.mxu0 0
        %1517 = vmatpush1.bf16.msra.mxu0 %v1328
        %1518 = vmatprep.subr.bf16.mxu0 0
        %1519 = vmatpush1.bf16.msra.mxu0 %v1329
        %1520 = vmatprep.subr.bf16.mxu0 0
        %1521 = vmatpush1.bf16.msra.mxu0 %v1330
        %1522 = vmatprep.subr.bf16.mxu0 0
        %1523 = vmatpush1.bf16.msra.mxu0 %v1331
        %1524 = vmatprep.subr.bf16.mxu0 0
        %1525 = vmatpush1.bf16.msra.mxu0 0
        %1526 = vmatprep.subr.bf16.mxu0 0
        %1527 = vmatpush1.bf16.msra.mxu0 0
        %1528 = vmatprep.subr.bf16.mxu0 0
        %1529 = vmatpush1.bf16.msra.mxu0 0
        %1530 = vmatprep.subr.bf16.mxu0 0
        %1531 = vmatpush1.bf16.msra.mxu0 0
        %1532 = vmatprep.subr.bf16.mxu0 0
        %1533 = vmatpush1.bf16.msra.mxu0 0
        %1534 = vmatprep.subr.bf16.mxu0 0
        %1535 = vmatpush1.bf16.msra.mxu0 0
        %1536 = vmatprep.subr.bf16.mxu0 0
        %1537 = vmatpush1.bf16.msra.mxu0 0
        %1538 = vmatprep.subr.bf16.mxu0 0
        %1539 = vmatpush1.bf16.msra.mxu0 0
        %1540 = vmatprep.mubr.bf16.mxu0 0
        %1541 = vmatmul.mubr.bf16.gmra.mrb[0].mxu0 %v1500
        %v1542 = vpop.f32.mrb[0].mxu0
        %v1543 = vadd.f32 0.0, %v1542
        %v1544 = vpop.f32.mrb[0].mxu0
        %v1545 = vpop.f32.mrb[0].mxu0
        %v1546 = vpop.f32.mrb[0].mxu0
        %1547 = vdwg.mxu0
        %1548 = vmatprep.subr.bf16.mxu0 0
        %1549 = vmatpush1.bf16.msra.mxu0 %v1332
        %1550 = vmatprep.subr.bf16.mxu0 0
        %1551 = vmatpush1.bf16.msra.mxu0 %v1333
        %1552 = vmatprep.subr.bf16.mxu0 0
        %1553 = vmatpush1.bf16.msra.mxu0 %v1334
        %1554 = vmatprep.subr.bf16.mxu0 0
        %1555 = vmatpush1.bf16.msra.mxu0 %v1335
        %1556 = vmatprep.subr.bf16.mxu0 0
        %1557 = vmatpush1.bf16.msra.mxu0 %v1336
        %1558 = vmatprep.subr.bf16.mxu0 0
        %1559 = vmatpush1.bf16.msra.mxu0 %v1337
        %1560 = vmatprep.subr.bf16.mxu0 0
        %1561 = vmatpush1.bf16.msra.mxu0 %v1338
        %1562 = vmatprep.subr.bf16.mxu0 0
        %1563 = vmatpush1.bf16.msra.mxu0 %v1339
        %1564 = vmatprep.subr.bf16.mxu0 0
        %1565 = vmatpush1.bf16.msra.mxu0 0
        %1566 = vmatprep.subr.bf16.mxu0 0
        %1567 = vmatpush1.bf16.msra.mxu0 0
        %1568 = vmatprep.subr.bf16.mxu0 0
        %1569 = vmatpush1.bf16.msra.mxu0 0
        %1570 = vmatprep.subr.bf16.mxu0 0
        %1571 = vmatpush1.bf16.msra.mxu0 0
        %1572 = vmatprep.subr.bf16.mxu0 0
        %1573 = vmatpush1.bf16.msra.mxu0 0
        %1574 = vmatprep.subr.bf16.mxu0 0
        %1575 = vmatpush1.bf16.msra.mxu0 0
        %1576 = vmatprep.subr.bf16.mxu0 0
        %1577 = vmatpush1.bf16.msra.mxu0 0
        %1578 = vmatprep.subr.bf16.mxu0 0
        %1579 = vmatpush1.bf16.msra.mxu0 0
        %1580 = vmatprep.mubr.bf16.mxu0 0
        %1581 = vmatmul.mubr.bf16.gmra.mrb[0].mxu0 %v1501
        %v1582 = vpop.f32.mrb[0].mxu0
        %v1583 = vadd.f32 0.0, %v1582
        %v1584 = vpop.f32.mrb[0].mxu0
        %v1585 = vpop.f32.mrb[0].mxu0
        %v1586 = vpop.f32.mrb[0].mxu0
        %1587 = vdwg.mxu0
        %1588 = vmatprep.subr.bf16.mxu0 0
        %1589 = vmatpush1.bf16.msra.mxu0 %v1340
        %1590 = vmatprep.subr.bf16.mxu0 0
        %1591 = vmatpush1.bf16.msra.mxu0 %v1341
        %1592 = vmatprep.subr.bf16.mxu0 0
        %1593 = vmatpush1.bf16.msra.mxu0 %v1342
        %1594 = vmatprep.subr.bf16.mxu0 0
        %1595 = vmatpush1.bf16.msra.mxu0 %v1343
        %1596 = vmatprep.subr.bf16.mxu0 0
        %1597 = vmatpush1.bf16.msra.mxu0 %v1344
        %1598 = vmatprep.subr.bf16.mxu0 0
        %1599 = vmatpush1.bf16.msra.mxu0 %v1345
        %1600 = vmatprep.subr.bf16.mxu0 0
        %1601 = vmatpush1.bf16.msra.mxu0 %v1346
        %1602 = vmatprep.subr.bf16.mxu0 0
        %1603 = vmatpush1.bf16.msra.mxu0 %v1347
        %1604 = vmatprep.subr.bf16.mxu0 0
        %1605 = vmatpush1.bf16.msra.mxu0 0
        %1606 = vmatprep.subr.bf16.mxu0 0
        %1607 = vmatpush1.bf16.msra.mxu0 0
        %1608 = vmatprep.subr.bf16.mxu0 0
        %1609 = vmatpush1.bf16.msra.mxu0 0
        %1610 = vmatprep.subr.bf16.mxu0 0
        %1611 = vmatpush1.bf16.msra.mxu0 0
        %1612 = vmatprep.subr.bf16.mxu0 0
        %1613 = vmatpush1.bf16.msra.mxu0 0
        %1614 = vmatprep.subr.bf16.mxu0 0
        %1615 = vmatpush1.bf16.msra.mxu0 0
        %1616 = vmatprep.subr.bf16.mxu0 0
        %1617 = vmatpush1.bf16.msra.mxu0 0
        %1618 = vmatprep.subr.bf16.mxu0 0
        %1619 = vmatpush1.bf16.msra.mxu0 0
        %1620 = vmatprep.mubr.bf16.mxu0 0
        %1621 = vmatmul.mubr.bf16.gmra.mrb[0].mxu0 %v1502
        %v1622 = vpop.f32.mrb[0].mxu0
        %v1623 = vadd.f32 0.0, %v1622
        %v1624 = vpop.f32.mrb[0].mxu0
        %v1625 = vpop.f32.mrb[0].mxu0
        %v1626 = vpop.f32.mrb[0].mxu0
        %1627 = vdwg.mxu0
        %1628 = vmatprep.subr.bf16.mxu0 0
        %1629 = vmatpush1.bf16.msra.mxu0 %v1348
        %1630 = vmatprep.subr.bf16.mxu0 0
        %1631 = vmatpush1.bf16.msra.mxu0 %v1349
        %1632 = vmatprep.subr.bf16.mxu0 0
        %1633 = vmatpush1.bf16.msra.mxu0 %v1350
        %1634 = vmatprep.subr.bf16.mxu0 0
        %1635 = vmatpush1.bf16.msra.mxu0 %v1351
        %1636 = vmatprep.subr.bf16.mxu0 0
        %1637 = vmatpush1.bf16.msra.mxu0 %v1352
        %1638 = vmatprep.subr.bf16.mxu0 0
        %1639 = vmatpush1.bf16.msra.mxu0 %v1353
        %1640 = vmatprep.subr.bf16.mxu0 0
        %1641 = vmatpush1.bf16.msra.mxu0 %v1354
        %1642 = vmatprep.subr.bf16.mxu0 0
        %1643 = vmatpush1.bf16.msra.mxu0 %v1355
        %1644 = vmatprep.subr.bf16.mxu0 0
        %1645 = vmatpush1.bf16.msra.mxu0 0
        %1646 = vmatprep.subr.bf16.mxu0 0
        %1647 = vmatpush1.bf16.msra.mxu0 0
        %1648 = vmatprep.subr.bf16.mxu0 0
        %1649 = vmatpush1.bf16.msra.mxu0 0
        %1650 = vmatprep.subr.bf16.mxu0 0
        %1651 = vmatpush1.bf16.msra.mxu0 0
        %1652 = vmatprep.subr.bf16.mxu0 0
        %1653 = vmatpush1.bf16.msra.mxu0 0
        %1654 = vmatprep.subr.bf16.mxu0 0
        %1655 = vmatpush1.bf16.msra.mxu0 0
        %1656 = vmatprep.subr.bf16.mxu0 0
        %1657 = vmatpush1.bf16.msra.mxu0 0
        %1658 = vmatprep.subr.bf16.mxu0 0
        %1659 = vmatpush1.bf16.msra.mxu0 0
        %1660 = vmatprep.mubr.bf16.mxu0 0
        %1661 = vmatmul.mubr.bf16.gmra.mrb[0].mxu0 %v1503
        %v1662 = vpop.f32.mrb[0].mxu0
        %v1663 = vadd.f32 0.0, %v1662
        %v1664 = vpop.f32.mrb[0].mxu0
        %v1665 = vpop.f32.mrb[0].mxu0
        %v1666 = vpop.f32.mrb[0].mxu0
        %1667 = vdwg.mxu0
        %1668 = vmax.xlane.f32.xlu0 %v1543
        %v1669 = vpop.xlane.xlu0 %1668
        %1670 = vmax.xlane.f32.xlu0 %v1583
        %v1671 = vpop.xlane.xlu0 %1670
        %1672 = vmax.xlane.f32.xlu0 %v1623
        %v1673 = vpop.xlane.xlu0 %1672
        %1674 = vmax.xlane.f32.xlu0 %v1663
        %v1675 = vpop.xlane.xlu0 %1674
        %v1676 = vsub.f32 %v1543, %v1669
        %v1677 = vsub.f32 %v1583, %v1671
        %v1678 = vsub.f32 %v1623, %v1673
        %v1679 = vsub.f32 %v1663, %v1675
        %v1680 = vmul.f32 %v1676, 1.442695
        %v1681 = vpow.pop %v1680
        %v1682 = vmul.f32 %v1677, 1.442695
        %v1683 = vpow.pop %v1682
        %v1684 = vmul.f32 %v1678, 1.442695
        %v1685 = vpow.pop %v1684
        %v1686 = vmul.f32 %v1679, 1.442695
        %v1687 = vpow.pop %v1686
        %s1688 = sld [smem:[#allocation2]]
        %1689 = vadd.xlane.f32.xlu0 %v1681
        %v1690 = vpop.xlane.xlu0 %1689
        %1691 = vadd.xlane.f32.xlu0 %v1683
        %v1692 = vpop.xlane.xlu0 %1691
        %1693 = vadd.xlane.f32.xlu0 %v1685
        %v1694 = vpop.xlane.xlu0 %1693
        %1695 = vadd.xlane.f32.xlu0 %v1687
        %v1696 = vpop.xlane.xlu0 %1695
        %v1697 = vrcp.pop %v1690
        %v1698 = vrcp.pop %v1692
        %v1699 = vrcp.pop %v1694
        %v1700 = vrcp.pop %v1696
        %v1701 = vstv %s1688
        %v1702 = vmul.f32 %v1701, %v1697
        %v1703 = vmul.f32 %v1701, %v1698
        %v1704 = vmul.f32 %v1701, %v1699
        %v1705 = vmul.f32 %v1701, %v1700
        %v1706 = vmul.f32 %v1681, %v1702
        %v1707 = vmul.f32 %v1683, %v1703
        %v1708 = vmul.f32 %v1685, %v1704
        %v1709 = vmul.f32 %v1687, %v1705
        %s1710 = scalar_lea.vmem %s381, 16 [#allocation6]
        %v1711 = vld [vmem:[%s1710] sm:$0xf]
        %v1712 = vld [vmem:[%s1710 + $0x4] sm:$0xf]
        %v1713 = vld [vmem:[%s1710 + $0x8] sm:$0xf]
        %v1714 = vld [vmem:[%s1710 + $0xc] sm:$0xf]
        %s1715 = scalar_lea.vmem [#allocation9], 64
        %v1716 = vld [vmem:[%s1715] sm:$0xf]
        %v1717 = vld [vmem:[%s1715 + $0x4] sm:$0xf]
        %v1718 = vld [vmem:[%s1715 + $0x8] sm:$0xf]
        %v1719 = vld [vmem:[%s1715 + $0xc] sm:$0xf]
        %v1720 = vld [vmem:[%s1715 + $0x10] sm:$0xf]
        %v1721 = vld [vmem:[%s1715 + $0x14] sm:$0xf]
        %v1722 = vld [vmem:[%s1715 + $0x18] sm:$0xf]
        %v1723 = vld [vmem:[%s1715 + $0x1c] sm:$0xf]
        %v1724 = vld [vmem:[%s1715 + $0x20] sm:$0xf]
        %v1725 = vld [vmem:[%s1715 + $0x24] sm:$0xf]
        %v1726 = vld [vmem:[%s1715 + $0x28] sm:$0xf]
        %v1727 = vld [vmem:[%s1715 + $0x2c] sm:$0xf]
        %v1728 = vld [vmem:[%s1715 + $0x30] sm:$0xf]
        %v1729 = vld [vmem:[%s1715 + $0x34] sm:$0xf]
        %v1730 = vld [vmem:[%s1715 + $0x38] sm:$0xf]
        %v1731 = vld [vmem:[%s1715 + $0x3c] sm:$0xf]
        %s1732 = scalar_lea.vmem %s4, 1
        %v1733 = vld [vmem:[%s1732] sm:$0x1]
        %v1735 = vlaneseq
        %v1736 = vshrl.u32 %v1735, 7
        %v1737 = vsub.s32 0, %v1736
        %v1738 = vrot.slane %v1733, %v1737
        %v1744 = vunpack.c.l.b16 %v1711
        %v1745 = vunpack.c.l.b16 %v1712
        %v1746 = vunpack.c.l.b16 %v1713
        %v1747 = vunpack.c.l.b16 %v1714
        %v1748 = vpack.c.b16 %v1745, %v1744
        %v1749 = vpack.c.b16 %v1747, %v1746
        %v1768 = vunpack.c.l.b16 %v1716
        %v1769 = vunpack.c.l.b16 %v1717
        %v1770 = vunpack.c.l.b16 %v1718
        %v1771 = vunpack.c.l.b16 %v1719
        %v1772 = vunpack.c.l.b16 %v1720
        %v1773 = vunpack.c.l.b16 %v1721
        %v1774 = vunpack.c.l.b16 %v1722
        %v1775 = vunpack.c.l.b16 %v1723
        %v1776 = vunpack.c.l.b16 %v1724
        %v1777 = vunpack.c.l.b16 %v1725
        %v1778 = vunpack.c.l.b16 %v1726
        %v1779 = vunpack.c.l.b16 %v1727
        %v1780 = vunpack.c.l.b16 %v1728
        %v1781 = vunpack.c.l.b16 %v1729
        %v1782 = vunpack.c.l.b16 %v1730
        %v1783 = vunpack.c.l.b16 %v1731
        %v1784 = vpack.c.b16 %v1769, %v1768
        %v1785 = vpack.c.b16 %v1771, %v1770
        %v1786 = vpack.c.b16 %v1773, %v1772
        %v1787 = vpack.c.b16 %v1775, %v1774
        %v1788 = vpack.c.b16 %v1777, %v1776
        %v1789 = vpack.c.b16 %v1779, %v1778
        %v1790 = vpack.c.b16 %v1781, %v1780
        %v1791 = vpack.c.b16 %v1783, %v1782
        %1800 = vmatprep.subr.bf16.mxu0 0
        %1801 = vmatpush1.bf16.msra.mxu0 %v1784
        %1802 = vmatprep.subr.bf16.mxu0 0
        %1803 = vmatpush1.bf16.msra.mxu0 %v1785
        %1804 = vmatprep.subr.bf16.mxu0 0
        %1805 = vmatpush1.bf16.msra.mxu0 %v1786
        %1806 = vmatprep.subr.bf16.mxu0 0
        %1807 = vmatpush1.bf16.msra.mxu0 %v1787
        %1808 = vmatprep.subr.bf16.mxu0 0
        %1809 = vmatpush1.bf16.msra.mxu0 %v1788
        %1810 = vmatprep.subr.bf16.mxu0 0
        %1811 = vmatpush1.bf16.msra.mxu0 %v1789
        %1812 = vmatprep.subr.bf16.mxu0 0
        %1813 = vmatpush1.bf16.msra.mxu0 %v1790
        %1814 = vmatprep.subr.bf16.mxu0 0
        %1815 = vmatpush1.bf16.msra.mxu0 %v1791
        %1816 = vmatprep.subr.bf16.mxu0 0
        %1817 = vmatpush1.bf16.msra.mxu0 0
        %1818 = vmatprep.subr.bf16.mxu0 0
        %1819 = vmatpush1.bf16.msra.mxu0 0
        %1820 = vmatprep.subr.bf16.mxu0 0
        %1821 = vmatpush1.bf16.msra.mxu0 0
        %1822 = vmatprep.subr.bf16.mxu0 0
        %1823 = vmatpush1.bf16.msra.mxu0 0
        %1824 = vmatprep.subr.bf16.mxu0 0
        %1825 = vmatpush1.bf16.msra.mxu0 0
        %1826 = vmatprep.subr.bf16.mxu0 0
        %1827 = vmatpush1.bf16.msra.mxu0 0
        %1828 = vmatprep.subr.bf16.mxu0 0
        %1829 = vmatpush1.bf16.msra.mxu0 0
        %1830 = vmatprep.subr.bf16.mxu0 0
        %1831 = vmatpush1.bf16.msra.mxu0 0
        %1832 = vmatprep.mubr.bf16.mxu0 0
        %1833 = vmatmul.mubr.bf16.gmra.mrb[0].mxu0 %v1748
        %v1834 = vpop.f32.mrb[0].mxu0
        %v1835 = vadd.f32 %v1738, %v1834
        %v1836 = vpop.f32.mrb[0].mxu0
        %v1837 = vpop.f32.mrb[0].mxu0
        %v1838 = vadd.f32 %v1738, %v1837
        %v1839 = vpop.f32.mrb[0].mxu0
        %1840 = vmatprep.mubr.bf16.mxu0 0
        %1841 = vmatmul.mubr.bf16.gmra.mrb[0].mxu0 %v1749
        %v1842 = vpop.f32.mrb[0].mxu0
        %v1843 = vadd.f32 %v1738, %v1842
        %v1844 = vpop.f32.mrb[0].mxu0
        %v1845 = vpop.f32.mrb[0].mxu0
        %v1846 = vadd.f32 %v1738, %v1845
        %v1847 = vpop.f32.mrb[0].mxu0
        %1848 = vdwg.mxu0
        %v1849 = vpack.c.bf16 %v1838, %v1835
        %v1850 = vpack.c.bf16 %v1846, %v1843
        %v1853 = vunpack.c.l.b16 %v1849
        %v1854 = vunpack.c.h.b16 %v1849
        %v1855 = vunpack.c.l.b16 %v1850
        %v1856 = vunpack.c.h.b16 %v1850
        %v1857 = vpack.c.b16 %v1853, %v1853
        %v1858 = vpack.c.b16 %v1854, %v1854
        %v1859 = vpack.c.b16 %v1855, %v1855
        %v1860 = vpack.c.b16 %v1856, %v1856
        %1865 = vmatprep.subr.bf16.mxu0 0
        %1866 = vmatpush1.bf16.msra.mxu0 %v1324
        %1867 = vmatprep.subr.bf16.mxu0 0
        %1868 = vmatpush1.bf16.msra.mxu0 %v1325
        %1869 = vmatprep.subr.bf16.mxu0 0
        %1870 = vmatpush1.bf16.msra.mxu0 %v1326
        %1871 = vmatprep.subr.bf16.mxu0 0
        %1872 = vmatpush1.bf16.msra.mxu0 %v1327
        %1873 = vmatprep.subr.bf16.mxu0 0
        %1874 = vmatpush1.bf16.msra.mxu0 %v1328
        %1875 = vmatprep.subr.bf16.mxu0 0
        %1876 = vmatpush1.bf16.msra.mxu0 %v1329
        %1877 = vmatprep.subr.bf16.mxu0 0
        %1878 = vmatpush1.bf16.msra.mxu0 %v1330
        %1879 = vmatprep.subr.bf16.mxu0 0
        %1880 = vmatpush1.bf16.msra.mxu0 %v1331
        %1881 = vmatprep.subr.bf16.mxu0 0
        %1882 = vmatpush1.bf16.msra.mxu0 0
        %1883 = vmatprep.subr.bf16.mxu0 0
        %1884 = vmatpush1.bf16.msra.mxu0 0
        %1885 = vmatprep.subr.bf16.mxu0 0
        %1886 = vmatpush1.bf16.msra.mxu0 0
        %1887 = vmatprep.subr.bf16.mxu0 0
        %1888 = vmatpush1.bf16.msra.mxu0 0
        %1889 = vmatprep.subr.bf16.mxu0 0
        %1890 = vmatpush1.bf16.msra.mxu0 0
        %1891 = vmatprep.subr.bf16.mxu0 0
        %1892 = vmatpush1.bf16.msra.mxu0 0
        %1893 = vmatprep.subr.bf16.mxu0 0
        %1894 = vmatpush1.bf16.msra.mxu0 0
        %1895 = vmatprep.subr.bf16.mxu0 0
        %1896 = vmatpush1.bf16.msra.mxu0 0
        %1897 = vmatprep.mubr.bf16.mxu0 0
        %1898 = vmatmul.mubr.bf16.gmra.mrb[0].mxu0 %v1857
        %v1899 = vpop.f32.mrb[0].mxu0
        %v1900 = vadd.f32 0.0, %v1899
        %v1901 = vpop.f32.mrb[0].mxu0
        %v1902 = vpop.f32.mrb[0].mxu0
        %v1903 = vpop.f32.mrb[0].mxu0
        %1904 = vdwg.mxu0
        %1905 = vmatprep.subr.bf16.mxu0 0
        %1906 = vmatpush1.bf16.msra.mxu0 %v1332
        %1907 = vmatprep.subr.bf16.mxu0 0
        %1908 = vmatpush1.bf16.msra.mxu0 %v1333
        %1909 = vmatprep.subr.bf16.mxu0 0
        %1910 = vmatpush1.bf16.msra.mxu0 %v1334
        %1911 = vmatprep.subr.bf16.mxu0 0
        %1912 = vmatpush1.bf16.msra.mxu0 %v1335
        %1913 = vmatprep.subr.bf16.mxu0 0
        %1914 = vmatpush1.bf16.msra.mxu0 %v1336
        %1915 = vmatprep.subr.bf16.mxu0 0
        %1916 = vmatpush1.bf16.msra.mxu0 %v1337
        %1917 = vmatprep.subr.bf16.mxu0 0
        %1918 = vmatpush1.bf16.msra.mxu0 %v1338
        %1919 = vmatprep.subr.bf16.mxu0 0
        %1920 = vmatpush1.bf16.msra.mxu0 %v1339
        %1921 = vmatprep.subr.bf16.mxu0 0
        %1922 = vmatpush1.bf16.msra.mxu0 0
        %1923 = vmatprep.subr.bf16.mxu0 0
        %1924 = vmatpush1.bf16.msra.mxu0 0
        %1925 = vmatprep.subr.bf16.mxu0 0
        %1926 = vmatpush1.bf16.msra.mxu0 0
        %1927 = vmatprep.subr.bf16.mxu0 0
        %1928 = vmatpush1.bf16.msra.mxu0 0
        %1929 = vmatprep.subr.bf16.mxu0 0
        %1930 = vmatpush1.bf16.msra.mxu0 0
        %1931 = vmatprep.subr.bf16.mxu0 0
        %1932 = vmatpush1.bf16.msra.mxu0 0
        %1933 = vmatprep.subr.bf16.mxu0 0
        %1934 = vmatpush1.bf16.msra.mxu0 0
        %1935 = vmatprep.subr.bf16.mxu0 0
        %1936 = vmatpush1.bf16.msra.mxu0 0
        %1937 = vmatprep.mubr.bf16.mxu0 0
        %1938 = vmatmul.mubr.bf16.gmra.mrb[0].mxu0 %v1858
        %v1939 = vpop.f32.mrb[0].mxu0
        %v1940 = vadd.f32 0.0, %v1939
        %v1941 = vpop.f32.mrb[0].mxu0
        %v1942 = vpop.f32.mrb[0].mxu0
        %v1943 = vpop.f32.mrb[0].mxu0
        %1944 = vdwg.mxu0
        %1945 = vmatprep.subr.bf16.mxu0 0
        %1946 = vmatpush1.bf16.msra.mxu0 %v1340
        %1947 = vmatprep.subr.bf16.mxu0 0
        %1948 = vmatpush1.bf16.msra.mxu0 %v1341
        %1949 = vmatprep.subr.bf16.mxu0 0
        %1950 = vmatpush1.bf16.msra.mxu0 %v1342
        %1951 = vmatprep.subr.bf16.mxu0 0
        %1952 = vmatpush1.bf16.msra.mxu0 %v1343
        %1953 = vmatprep.subr.bf16.mxu0 0
        %1954 = vmatpush1.bf16.msra.mxu0 %v1344
        %1955 = vmatprep.subr.bf16.mxu0 0
        %1956 = vmatpush1.bf16.msra.mxu0 %v1345
        %1957 = vmatprep.subr.bf16.mxu0 0
        %1958 = vmatpush1.bf16.msra.mxu0 %v1346
        %1959 = vmatprep.subr.bf16.mxu0 0
        %1960 = vmatpush1.bf16.msra.mxu0 %v1347
        %1961 = vmatprep.subr.bf16.mxu0 0
        %1962 = vmatpush1.bf16.msra.mxu0 0
        %1963 = vmatprep.subr.bf16.mxu0 0
        %1964 = vmatpush1.bf16.msra.mxu0 0
        %1965 = vmatprep.subr.bf16.mxu0 0
        %1966 = vmatpush1.bf16.msra.mxu0 0
        %1967 = vmatprep.subr.bf16.mxu0 0
        %1968 = vmatpush1.bf16.msra.mxu0 0
        %1969 = vmatprep.subr.bf16.mxu0 0
        %1970 = vmatpush1.bf16.msra.mxu0 0
        %1971 = vmatprep.subr.bf16.mxu0 0
        %1972 = vmatpush1.bf16.msra.mxu0 0
        %1973 = vmatprep.subr.bf16.mxu0 0
        %1974 = vmatpush1.bf16.msra.mxu0 0
        %1975 = vmatprep.subr.bf16.mxu0 0
        %1976 = vmatpush1.bf16.msra.mxu0 0
        %1977 = vmatprep.mubr.bf16.mxu0 0
        %1978 = vmatmul.mubr.bf16.gmra.mrb[0].mxu0 %v1859
        %v1979 = vpop.f32.mrb[0].mxu0
        %v1980 = vadd.f32 0.0, %v1979
        %v1981 = vpop.f32.mrb[0].mxu0
        %v1982 = vpop.f32.mrb[0].mxu0
        %v1983 = vpop.f32.mrb[0].mxu0
        %1984 = vdwg.mxu0
        %1985 = vmatprep.subr.bf16.mxu0 0
        %1986 = vmatpush1.bf16.msra.mxu0 %v1348
        %1987 = vmatprep.subr.bf16.mxu0 0
        %1988 = vmatpush1.bf16.msra.mxu0 %v1349
        %1989 = vmatprep.subr.bf16.mxu0 0
        %1990 = vmatpush1.bf16.msra.mxu0 %v1350
        %1991 = vmatprep.subr.bf16.mxu0 0
        %1992 = vmatpush1.bf16.msra.mxu0 %v1351
        %1993 = vmatprep.subr.bf16.mxu0 0
        %1994 = vmatpush1.bf16.msra.mxu0 %v1352
        %1995 = vmatprep.subr.bf16.mxu0 0
        %1996 = vmatpush1.bf16.msra.mxu0 %v1353
        %1997 = vmatprep.subr.bf16.mxu0 0
        %1998 = vmatpush1.bf16.msra.mxu0 %v1354
        %1999 = vmatprep.subr.bf16.mxu0 0
        %2000 = vmatpush1.bf16.msra.mxu0 %v1355
        %2001 = vmatprep.subr.bf16.mxu0 0
        %2002 = vmatpush1.bf16.msra.mxu0 0
        %2003 = vmatprep.subr.bf16.mxu0 0
        %2004 = vmatpush1.bf16.msra.mxu0 0
        %2005 = vmatprep.subr.bf16.mxu0 0
        %2006 = vmatpush1.bf16.msra.mxu0 0
        %2007 = vmatprep.subr.bf16.mxu0 0
        %2008 = vmatpush1.bf16.msra.mxu0 0
        %2009 = vmatprep.subr.bf16.mxu0 0
        %2010 = vmatpush1.bf16.msra.mxu0 0
        %2011 = vmatprep.subr.bf16.mxu0 0
        %2012 = vmatpush1.bf16.msra.mxu0 0
        %2013 = vmatprep.subr.bf16.mxu0 0
        %2014 = vmatpush1.bf16.msra.mxu0 0
        %2015 = vmatprep.subr.bf16.mxu0 0
        %2016 = vmatpush1.bf16.msra.mxu0 0
        %2017 = vmatprep.mubr.bf16.mxu0 0
        %2018 = vmatmul.mubr.bf16.gmra.mrb[0].mxu0 %v1860
        %v2019 = vpop.f32.mrb[0].mxu0
        %v2020 = vadd.f32 0.0, %v2019
        %v2021 = vpop.f32.mrb[0].mxu0
        %v2022 = vpop.f32.mrb[0].mxu0
        %v2023 = vpop.f32.mrb[0].mxu0
        %2024 = vdwg.mxu0
        %2025 = vmax.xlane.f32.xlu0 %v1900
        %v2026 = vpop.xlane.xlu0 %2025
        %2027 = vmax.xlane.f32.xlu0 %v1940
        %v2028 = vpop.xlane.xlu0 %2027
        %2029 = vmax.xlane.f32.xlu0 %v1980
        %v2030 = vpop.xlane.xlu0 %2029
        %2031 = vmax.xlane.f32.xlu0 %v2020
        %v2032 = vpop.xlane.xlu0 %2031
        %v2033 = vsub.f32 %v1900, %v2026
        %v2034 = vsub.f32 %v1940, %v2028
        %v2035 = vsub.f32 %v1980, %v2030
        %v2036 = vsub.f32 %v2020, %v2032
        %v2037 = vmul.f32 %v2033, 1.442695
        %v2038 = vpow.pop %v2037
        %v2039 = vmul.f32 %v2034, 1.442695
        %v2040 = vpow.pop %v2039
        %v2041 = vmul.f32 %v2035, 1.442695
        %v2042 = vpow.pop %v2041
        %v2043 = vmul.f32 %v2036, 1.442695
        %v2044 = vpow.pop %v2043
        %s2045 = sld [smem:[#allocation2 + $0x1]]
        %2046 = vadd.xlane.f32.xlu0 %v2038
        %v2047 = vpop.xlane.xlu0 %2046
        %2048 = vadd.xlane.f32.xlu0 %v2040
        %v2049 = vpop.xlane.xlu0 %2048
        %2050 = vadd.xlane.f32.xlu0 %v2042
        %v2051 = vpop.xlane.xlu0 %2050
        %2052 = vadd.xlane.f32.xlu0 %v2044
        %v2053 = vpop.xlane.xlu0 %2052
        %v2054 = vrcp.pop %v2047
        %v2055 = vrcp.pop %v2049
        %v2056 = vrcp.pop %v2051
        %v2057 = vrcp.pop %v2053
        %v2058 = vstv %s2045
        %v2059 = vmul.f32 %v2058, %v2054
        %v2060 = vmul.f32 %v2058, %v2055
        %v2061 = vmul.f32 %v2058, %v2056
        %v2062 = vmul.f32 %v2058, %v2057
        %v2063 = vmul.f32 %v2038, %v2059
        %v2064 = vmul.f32 %v2040, %v2060
        %v2065 = vmul.f32 %v2042, %v2061
        %v2066 = vmul.f32 %v2044, %v2062
        %v2067 = vadd.f32 %v1706, %v2063
        %v2068 = vadd.f32 %v1707, %v2064
        %v2069 = vadd.f32 %v1708, %v2065
        %v2070 = vadd.f32 %v1709, %v2066
        %s2071 = scalar_lea.vmem %s381, 32 [#allocation6]
        %v2072 = vld [vmem:[%s2071] sm:$0xf]
        %v2073 = vld [vmem:[%s2071 + $0x4] sm:$0xf]
        %v2074 = vld [vmem:[%s2071 + $0x8] sm:$0xf]
        %v2075 = vld [vmem:[%s2071 + $0xc] sm:$0xf]
        %s2076 = scalar_lea.vmem [#allocation9], 128
        %v2077 = vld [vmem:[%s2076] sm:$0xf]
        %v2078 = vld [vmem:[%s2076 + $0x4] sm:$0xf]
        %v2079 = vld [vmem:[%s2076 + $0x8] sm:$0xf]
        %v2080 = vld [vmem:[%s2076 + $0xc] sm:$0xf]
        %v2081 = vld [vmem:[%s2076 + $0x10] sm:$0xf]
        %v2082 = vld [vmem:[%s2076 + $0x14] sm:$0xf]
        %v2083 = vld [vmem:[%s2076 + $0x18] sm:$0xf]
        %v2084 = vld [vmem:[%s2076 + $0x1c] sm:$0xf]
        %v2085 = vld [vmem:[%s2076 + $0x20] sm:$0xf]
        %v2086 = vld [vmem:[%s2076 + $0x24] sm:$0xf]
        %v2087 = vld [vmem:[%s2076 + $0x28] sm:$0xf]
        %v2088 = vld [vmem:[%s2076 + $0x2c] sm:$0xf]
        %v2089 = vld [vmem:[%s2076 + $0x30] sm:$0xf]
        %v2090 = vld [vmem:[%s2076 + $0x34] sm:$0xf]
        %v2091 = vld [vmem:[%s2076 + $0x38] sm:$0xf]
        %v2092 = vld [vmem:[%s2076 + $0x3c] sm:$0xf]
        %s2093 = scalar_lea.vmem %s4, 2
        %v2094 = vld [vmem:[%s2093] sm:$0x1]
        %v2096 = vlaneseq
        %v2097 = vshrl.u32 %v2096, 7
        %v2098 = vsub.s32 0, %v2097
        %v2099 = vrot.slane %v2094, %v2098
        %v2105 = vunpack.c.l.b16 %v2072
        %v2106 = vunpack.c.l.b16 %v2073
        %v2107 = vunpack.c.l.b16 %v2074
        %v2108 = vunpack.c.l.b16 %v2075
        %v2109 = vpack.c.b16 %v2106, %v2105
        %v2110 = vpack.c.b16 %v2108, %v2107
        %v2129 = vunpack.c.l.b16 %v2077
        %v2130 = vunpack.c.l.b16 %v2078
        %v2131 = vunpack.c.l.b16 %v2079
        %v2132 = vunpack.c.l.b16 %v2080
        %v2133 = vunpack.c.l.b16 %v2081
        %v2134 = vunpack.c.l.b16 %v2082
        %v2135 = vunpack.c.l.b16 %v2083
        %v2136 = vunpack.c.l.b16 %v2084
        %v2137 = vunpack.c.l.b16 %v2085
        %v2138 = vunpack.c.l.b16 %v2086
        %v2139 = vunpack.c.l.b16 %v2087
        %v2140 = vunpack.c.l.b16 %v2088
        %v2141 = vunpack.c.l.b16 %v2089
        %v2142 = vunpack.c.l.b16 %v2090
        %v2143 = vunpack.c.l.b16 %v2091
        %v2144 = vunpack.c.l.b16 %v2092
        %v2145 = vpack.c.b16 %v2130, %v2129
        %v2146 = vpack.c.b16 %v2132, %v2131
        %v2147 = vpack.c.b16 %v2134, %v2133
        %v2148 = vpack.c.b16 %v2136, %v2135
        %v2149 = vpack.c.b16 %v2138, %v2137
        %v2150 = vpack.c.b16 %v2140, %v2139
        %v2151 = vpack.c.b16 %v2142, %v2141
        %v2152 = vpack.c.b16 %v2144, %v2143
        %2161 = vmatprep.subr.bf16.mxu0 0
        %2162 = vmatpush1.bf16.msra.mxu0 %v2145
        %2163 = vmatprep.subr.bf16.mxu0 0
        %2164 = vmatpush1.bf16.msra.mxu0 %v2146
        %2165 = vmatprep.subr.bf16.mxu0 0
        %2166 = vmatpush1.bf16.msra.mxu0 %v2147
        %2167 = vmatprep.subr.bf16.mxu0 0
        %2168 = vmatpush1.bf16.msra.mxu0 %v2148
        %2169 = vmatprep.subr.bf16.mxu0 0
        %2170 = vmatpush1.bf16.msra.mxu0 %v2149
        %2171 = vmatprep.subr.bf16.mxu0 0
        %2172 = vmatpush1.bf16.msra.mxu0 %v2150
        %2173 = vmatprep.subr.bf16.mxu0 0
        %2174 = vmatpush1.bf16.msra.mxu0 %v2151
        %2175 = vmatprep.subr.bf16.mxu0 0
        %2176 = vmatpush1.bf16.msra.mxu0 %v2152
        %2177 = vmatprep.subr.bf16.mxu0 0
        %2178 = vmatpush1.bf16.msra.mxu0 0
        %2179 = vmatprep.subr.bf16.mxu0 0
        %2180 = vmatpush1.bf16.msra.mxu0 0
        %2181 = vmatprep.subr.bf16.mxu0 0
        %2182 = vmatpush1.bf16.msra.mxu0 0
        %2183 = vmatprep.subr.bf16.mxu0 0
        %2184 = vmatpush1.bf16.msra.mxu0 0
        %2185 = vmatprep.subr.bf16.mxu0 0
        %2186 = vmatpush1.bf16.msra.mxu0 0
        %2187 = vmatprep.subr.bf16.mxu0 0
        %2188 = vmatpush1.bf16.msra.mxu0 0
        %2189 = vmatprep.subr.bf16.mxu0 0
        %2190 = vmatpush1.bf16.msra.mxu0 0
        %2191 = vmatprep.subr.bf16.mxu0 0
        %2192 = vmatpush1.bf16.msra.mxu0 0
        %2193 = vmatprep.mubr.bf16.mxu0 0
        %2194 = vmatmul.mubr.bf16.gmra.mrb[0].mxu0 %v2109
        %v2195 = vpop.f32.mrb[0].mxu0
        %v2196 = vadd.f32 %v2099, %v2195
        %v2197 = vpop.f32.mrb[0].mxu0
        %v2198 = vpop.f32.mrb[0].mxu0
        %v2199 = vadd.f32 %v2099, %v2198
        %v2200 = vpop.f32.mrb[0].mxu0
        %2201 = vmatprep.mubr.bf16.mxu0 0
        %2202 = vmatmul.mubr.bf16.gmra.mrb[0].mxu0 %v2110
        %v2203 = vpop.f32.mrb[0].mxu0
        %v2204 = vadd.f32 %v2099, %v2203
        %v2205 = vpop.f32.mrb[0].mxu0
        %v2206 = vpop.f32.mrb[0].mxu0
        %v2207 = vadd.f32 %v2099, %v2206
        %v2208 = vpop.f32.mrb[0].mxu0
        %2209 = vdwg.mxu0
        %v2210 = vpack.c.bf16 %v2199, %v2196
        %v2211 = vpack.c.bf16 %v2207, %v2204
        %v2214 = vunpack.c.l.b16 %v2210
        %v2215 = vunpack.c.h.b16 %v2210
        %v2216 = vunpack.c.l.b16 %v2211
        %v2217 = vunpack.c.h.b16 %v2211
        %v2218 = vpack.c.b16 %v2214, %v2214
        %v2219 = vpack.c.b16 %v2215, %v2215
        %v2220 = vpack.c.b16 %v2216, %v2216
        %v2221 = vpack.c.b16 %v2217, %v2217
        %2226 = vmatprep.subr.bf16.mxu0 0
        %2227 = vmatpush1.bf16.msra.mxu0 %v1324
        %2228 = vmatprep.subr.bf16.mxu0 0
        %2229 = vmatpush1.bf16.msra.mxu0 %v1325
        %2230 = vmatprep.subr.bf16.mxu0 0
        %2231 = vmatpush1.bf16.msra.mxu0 %v1326
        %2232 = vmatprep.subr.bf16.mxu0 0
        %2233 = vmatpush1.bf16.msra.mxu0 %v1327
        %2234 = vmatprep.subr.bf16.mxu0 0
        %2235 = vmatpush1.bf16.msra.mxu0 %v1328
        %2236 = vmatprep.subr.bf16.mxu0 0
        %2237 = vmatpush1.bf16.msra.mxu0 %v1329
        %2238 = vmatprep.subr.bf16.mxu0 0
        %2239 = vmatpush1.bf16.msra.mxu0 %v1330
        %2240 = vmatprep.subr.bf16.mxu0 0
        %2241 = vmatpush1.bf16.msra.mxu0 %v1331
        %2242 = vmatprep.subr.bf16.mxu0 0
        %2243 = vmatpush1.bf16.msra.mxu0 0
        %2244 = vmatprep.subr.bf16.mxu0 0
        %2245 = vmatpush1.bf16.msra.mxu0 0
        %2246 = vmatprep.subr.bf16.mxu0 0
        %2247 = vmatpush1.bf16.msra.mxu0 0
        %2248 = vmatprep.subr.bf16.mxu0 0
        %2249 = vmatpush1.bf16.msra.mxu0 0
        %2250 = vmatprep.subr.bf16.mxu0 0
        %2251 = vmatpush1.bf16.msra.mxu0 0
        %2252 = vmatprep.subr.bf16.mxu0 0
        %2253 = vmatpush1.bf16.msra.mxu0 0
        %2254 = vmatprep.subr.bf16.mxu0 0
        %2255 = vmatpush1.bf16.msra.mxu0 0
        %2256 = vmatprep.subr.bf16.mxu0 0
        %2257 = vmatpush1.bf16.msra.mxu0 0
        %2258 = vmatprep.mubr.bf16.mxu0 0
        %2259 = vmatmul.mubr.bf16.gmra.mrb[0].mxu0 %v2218
        %v2260 = vpop.f32.mrb[0].mxu0
        %v2261 = vadd.f32 0.0, %v2260
        %v2262 = vpop.f32.mrb[0].mxu0
        %v2263 = vpop.f32.mrb[0].mxu0
        %v2264 = vpop.f32.mrb[0].mxu0
        %2265 = vdwg.mxu0
        %2266 = vmatprep.subr.bf16.mxu0 0
        %2267 = vmatpush1.bf16.msra.mxu0 %v1332
        %2268 = vmatprep.subr.bf16.mxu0 0
        %2269 = vmatpush1.bf16.msra.mxu0 %v1333
        %2270 = vmatprep.subr.bf16.mxu0 0
        %2271 = vmatpush1.bf16.msra.mxu0 %v1334
        %2272 = vmatprep.subr.bf16.mxu0 0
        %2273 = vmatpush1.bf16.msra.mxu0 %v1335
        %2274 = vmatprep.subr.bf16.mxu0 0
        %2275 = vmatpush1.bf16.msra.mxu0 %v1336
        %2276 = vmatprep.subr.bf16.mxu0 0
        %2277 = vmatpush1.bf16.msra.mxu0 %v1337
        %2278 = vmatprep.subr.bf16.mxu0 0
        %2279 = vmatpush1.bf16.msra.mxu0 %v1338
        %2280 = vmatprep.subr.bf16.mxu0 0
        %2281 = vmatpush1.bf16.msra.mxu0 %v1339
        %2282 = vmatprep.subr.bf16.mxu0 0
        %2283 = vmatpush1.bf16.msra.mxu0 0
        %2284 = vmatprep.subr.bf16.mxu0 0
        %2285 = vmatpush1.bf16.msra.mxu0 0
        %2286 = vmatprep.subr.bf16.mxu0 0
        %2287 = vmatpush1.bf16.msra.mxu0 0
        %2288 = vmatprep.subr.bf16.mxu0 0
        %2289 = vmatpush1.bf16.msra.mxu0 0
        %2290 = vmatprep.subr.bf16.mxu0 0
        %2291 = vmatpush1.bf16.msra.mxu0 0
        %2292 = vmatprep.subr.bf16.mxu0 0
        %2293 = vmatpush1.bf16.msra.mxu0 0
        %2294 = vmatprep.subr.bf16.mxu0 0
        %2295 = vmatpush1.bf16.msra.mxu0 0
        %2296 = vmatprep.subr.bf16.mxu0 0
        %2297 = vmatpush1.bf16.msra.mxu0 0
        %2298 = vmatprep.mubr.bf16.mxu0 0
        %2299 = vmatmul.mubr.bf16.gmra.mrb[0].mxu0 %v2219
        %v2300 = vpop.f32.mrb[0].mxu0
        %v2301 = vadd.f32 0.0, %v2300
        %v2302 = vpop.f32.mrb[0].mxu0
        %v2303 = vpop.f32.mrb[0].mxu0
        %v2304 = vpop.f32.mrb[0].mxu0
        %2305 = vdwg.mxu0
        %2306 = vmatprep.subr.bf16.mxu0 0
        %2307 = vmatpush1.bf16.msra.mxu0 %v1340
        %2308 = vmatprep.subr.bf16.mxu0 0
        %2309 = vmatpush1.bf16.msra.mxu0 %v1341
        %2310 = vmatprep.subr.bf16.mxu0 0
        %2311 = vmatpush1.bf16.msra.mxu0 %v1342
        %2312 = vmatprep.subr.bf16.mxu0 0
        %2313 = vmatpush1.bf16.msra.mxu0 %v1343
        %2314 = vmatprep.subr.bf16.mxu0 0
        %2315 = vmatpush1.bf16.msra.mxu0 %v1344
        %2316 = vmatprep.subr.bf16.mxu0 0
        %2317 = vmatpush1.bf16.msra.mxu0 %v1345
        %2318 = vmatprep.subr.bf16.mxu0 0
        %2319 = vmatpush1.bf16.msra.mxu0 %v1346
        %2320 = vmatprep.subr.bf16.mxu0 0
        %2321 = vmatpush1.bf16.msra.mxu0 %v1347
        %2322 = vmatprep.subr.bf16.mxu0 0
        %2323 = vmatpush1.bf16.msra.mxu0 0
        %2324 = vmatprep.subr.bf16.mxu0 0
        %2325 = vmatpush1.bf16.msra.mxu0 0
        %2326 = vmatprep.subr.bf16.mxu0 0
        %2327 = vmatpush1.bf16.msra.mxu0 0
        %2328 = vmatprep.subr.bf16.mxu0 0
        %2329 = vmatpush1.bf16.msra.mxu0 0
        %2330 = vmatprep.subr.bf16.mxu0 0
        %2331 = vmatpush1.bf16.msra.mxu0 0
        %2332 = vmatprep.subr.bf16.mxu0 0
        %2333 = vmatpush1.bf16.msra.mxu0 0
        %2334 = vmatprep.subr.bf16.mxu0 0
        %2335 = vmatpush1.bf16.msra.mxu0 0
        %2336 = vmatprep.subr.bf16.mxu0 0
        %2337 = vmatpush1.bf16.msra.mxu0 0
        %2338 = vmatprep.mubr.bf16.mxu0 0
        %2339 = vmatmul.mubr.bf16.gmra.mrb[0].mxu0 %v2220
        %v2340 = vpop.f32.mrb[0].mxu0
        %v2341 = vadd.f32 0.0, %v2340
        %v2342 = vpop.f32.mrb[0].mxu0
        %v2343 = vpop.f32.mrb[0].mxu0
        %v2344 = vpop.f32.mrb[0].mxu0
        %2345 = vdwg.mxu0
        %2346 = vmatprep.subr.bf16.mxu0 0
        %2347 = vmatpush1.bf16.msra.mxu0 %v1348
        %2348 = vmatprep.subr.bf16.mxu0 0
        %2349 = vmatpush1.bf16.msra.mxu0 %v1349
        %2350 = vmatprep.subr.bf16.mxu0 0
        %2351 = vmatpush1.bf16.msra.mxu0 %v1350
        %2352 = vmatprep.subr.bf16.mxu0 0
        %2353 = vmatpush1.bf16.msra.mxu0 %v1351
        %2354 = vmatprep.subr.bf16.mxu0 0
        %2355 = vmatpush1.bf16.msra.mxu0 %v1352
        %2356 = vmatprep.subr.bf16.mxu0 0
        %2357 = vmatpush1.bf16.msra.mxu0 %v1353
        %2358 = vmatprep.subr.bf16.mxu0 0
        %2359 = vmatpush1.bf16.msra.mxu0 %v1354
        %2360 = vmatprep.subr.bf16.mxu0 0
        %2361 = vmatpush1.bf16.msra.mxu0 %v1355
        %2362 = vmatprep.subr.bf16.mxu0 0
        %2363 = vmatpush1.bf16.msra.mxu0 0
        %2364 = vmatprep.subr.bf16.mxu0 0
        %2365 = vmatpush1.bf16.msra.mxu0 0
        %2366 = vmatprep.subr.bf16.mxu0 0
        %2367 = vmatpush1.bf16.msra.mxu0 0
        %2368 = vmatprep.subr.bf16.mxu0 0
        %2369 = vmatpush1.bf16.msra.mxu0 0
        %2370 = vmatprep.subr.bf16.mxu0 0
        %2371 = vmatpush1.bf16.msra.mxu0 0
        %2372 = vmatprep.subr.bf16.mxu0 0
        %2373 = vmatpush1.bf16.msra.mxu0 0
        %2374 = vmatprep.subr.bf16.mxu0 0
        %2375 = vmatpush1.bf16.msra.mxu0 0
        %2376 = vmatprep.subr.bf16.mxu0 0
        %2377 = vmatpush1.bf16.msra.mxu0 0
        %2378 = vmatprep.mubr.bf16.mxu0 0
        %2379 = vmatmul.mubr.bf16.gmra.mrb[0].mxu0 %v2221
        %v2380 = vpop.f32.mrb[0].mxu0
        %v2381 = vadd.f32 0.0, %v2380
        %v2382 = vpop.f32.mrb[0].mxu0
        %v2383 = vpop.f32.mrb[0].mxu0
        %v2384 = vpop.f32.mrb[0].mxu0
        %2385 = vdwg.mxu0
        %2386 = vmax.xlane.f32.xlu0 %v2261
        %v2387 = vpop.xlane.xlu0 %2386
        %2388 = vmax.xlane.f32.xlu0 %v2301
        %v2389 = vpop.xlane.xlu0 %2388
        %2390 = vmax.xlane.f32.xlu0 %v2341
        %v2391 = vpop.xlane.xlu0 %2390
        %2392 = vmax.xlane.f32.xlu0 %v2381
        %v2393 = vpop.xlane.xlu0 %2392
        %v2394 = vsub.f32 %v2261, %v2387
        %v2395 = vsub.f32 %v2301, %v2389
        %v2396 = vsub.f32 %v2341, %v2391
        %v2397 = vsub.f32 %v2381, %v2393
        %v2398 = vmul.f32 %v2394, 1.442695
        %v2399 = vpow.pop %v2398
        %v2400 = vmul.f32 %v2395, 1.442695
        %v2401 = vpow.pop %v2400
        %v2402 = vmul.f32 %v2396, 1.442695
        %v2403 = vpow.pop %v2402
        %v2404 = vmul.f32 %v2397, 1.442695
        %v2405 = vpow.pop %v2404
        %s2406 = sld [smem:[#allocation2 + $0x2]]
        %2407 = vadd.xlane.f32.xlu0 %v2399
        %v2408 = vpop.xlane.xlu0 %2407
        %2409 = vadd.xlane.f32.xlu0 %v2401
        %v2410 = vpop.xlane.xlu0 %2409
        %2411 = vadd.xlane.f32.xlu0 %v2403
        %v2412 = vpop.xlane.xlu0 %2411
        %2413 = vadd.xlane.f32.xlu0 %v2405
        %v2414 = vpop.xlane.xlu0 %2413
        %v2415 = vrcp.pop %v2408
        %v2416 = vrcp.pop %v2410
        %v2417 = vrcp.pop %v2412
        %v2418 = vrcp.pop %v2414
        %v2419 = vstv %s2406
        %v2420 = vmul.f32 %v2419, %v2415
        %v2421 = vmul.f32 %v2419, %v2416
        %v2422 = vmul.f32 %v2419, %v2417
        %v2423 = vmul.f32 %v2419, %v2418
        %v2424 = vmul.f32 %v2399, %v2420
        %v2425 = vmul.f32 %v2401, %v2421
        %v2426 = vmul.f32 %v2403, %v2422
        %v2427 = vmul.f32 %v2405, %v2423
        %v2428 = vadd.f32 %v2067, %v2424
        %v2429 = vadd.f32 %v2068, %v2425
        %v2430 = vadd.f32 %v2069, %v2426
        %v2431 = vadd.f32 %v2070, %v2427
        %v2432 = vpack.c.bf16 %v2428, %v2428
        %v2433 = vpack.c.bf16 %v2429, %v2429
        %v2434 = vpack.c.bf16 %v2430, %v2430
        %v2435 = vpack.c.bf16 %v2431, %v2431
        %2436 = vmatprep.subr.bf16.mxu0 0
        %2437 = vmatpush1.bf16.msra.mxu0 %v1164
        %2438 = vmatprep.subr.bf16.mxu0 0
        %2439 = vmatpush1.bf16.msra.mxu0 %v1165
        %2440 = vmatprep.subr.bf16.mxu0 0
        %2441 = vmatpush1.bf16.msra.mxu0 %v1166
        %2442 = vmatprep.subr.bf16.mxu0 0
        %2443 = vmatpush1.bf16.msra.mxu0 %v1167
        %2444 = vmatprep.subr.bf16.mxu0 0
        %2445 = vmatpush1.bf16.msra.mxu0 %v1168
        %2446 = vmatprep.subr.bf16.mxu0 0
        %2447 = vmatpush1.bf16.msra.mxu0 %v1169
        %2448 = vmatprep.subr.bf16.mxu0 0
        %2449 = vmatpush1.bf16.msra.mxu0 %v1170
        %2450 = vmatprep.subr.bf16.mxu0 0
        %2451 = vmatpush1.bf16.msra.mxu0 %v1171
        %2452 = vmatprep.subr.bf16.mxu0 0
        %2453 = vmatpush1.bf16.msra.mxu0 0
        %2454 = vmatprep.subr.bf16.mxu0 0
        %2455 = vmatpush1.bf16.msra.mxu0 0
        %2456 = vmatprep.subr.bf16.mxu0 0
        %2457 = vmatpush1.bf16.msra.mxu0 0
        %2458 = vmatprep.subr.bf16.mxu0 0
        %2459 = vmatpush1.bf16.msra.mxu0 0
        %2460 = vmatprep.subr.bf16.mxu0 0
        %2461 = vmatpush1.bf16.msra.mxu0 0
        %2462 = vmatprep.subr.bf16.mxu0 0
        %2463 = vmatpush1.bf16.msra.mxu0 0
        %2464 = vmatprep.subr.bf16.mxu0 0
        %2465 = vmatpush1.bf16.msra.mxu0 0
        %2466 = vmatprep.subr.bf16.mxu0 0
        %2467 = vmatpush1.bf16.msra.mxu0 0
        %2468 = vmatprep.mubr.bf16.mxu0 0
        %2469 = vmatmul.mubr.bf16.gmra.mrb[0].mxu0 %v2432
        %v2470 = vpop.f32.mrb[0].mxu0
        %v2471 = vadd.f32 0.0, %v2470
        %v2472 = vpop.f32.mrb[0].mxu0
        %v2473 = vpop.f32.mrb[0].mxu0
        %v2474 = vpop.f32.mrb[0].mxu0
        %2475 = vdwg.mxu0
        %2476 = vmatprep.subr.bf16.mxu0 0
        %2477 = vmatpush1.bf16.msra.mxu0 %v1172
        %2478 = vmatprep.subr.bf16.mxu0 0
        %2479 = vmatpush1.bf16.msra.mxu0 %v1173
        %2480 = vmatprep.subr.bf16.mxu0 0
        %2481 = vmatpush1.bf16.msra.mxu0 %v1174
        %2482 = vmatprep.subr.bf16.mxu0 0
        %2483 = vmatpush1.bf16.msra.mxu0 %v1175
        %2484 = vmatprep.subr.bf16.mxu0 0
        %2485 = vmatpush1.bf16.msra.mxu0 %v1176
        %2486 = vmatprep.subr.bf16.mxu0 0
        %2487 = vmatpush1.bf16.msra.mxu0 %v1177
        %2488 = vmatprep.subr.bf16.mxu0 0
        %2489 = vmatpush1.bf16.msra.mxu0 %v1178
        %2490 = vmatprep.subr.bf16.mxu0 0
        %2491 = vmatpush1.bf16.msra.mxu0 %v1179
        %2492 = vmatprep.subr.bf16.mxu0 0
        %2493 = vmatpush1.bf16.msra.mxu0 0
        %2494 = vmatprep.subr.bf16.mxu0 0
        %2495 = vmatpush1.bf16.msra.mxu0 0
        %2496 = vmatprep.subr.bf16.mxu0 0
        %2497 = vmatpush1.bf16.msra.mxu0 0
        %2498 = vmatprep.subr.bf16.mxu0 0
        %2499 = vmatpush1.bf16.msra.mxu0 0
        %2500 = vmatprep.subr.bf16.mxu0 0
        %2501 = vmatpush1.bf16.msra.mxu0 0
        %2502 = vmatprep.subr.bf16.mxu0 0
        %2503 = vmatpush1.bf16.msra.mxu0 0
        %2504 = vmatprep.subr.bf16.mxu0 0
        %2505 = vmatpush1.bf16.msra.mxu0 0
        %2506 = vmatprep.subr.bf16.mxu0 0
        %2507 = vmatpush1.bf16.msra.mxu0 0
        %2508 = vmatprep.mubr.bf16.mxu0 0
        %2509 = vmatmul.mubr.bf16.gmra.mrb[0].mxu0 %v2433
        %v2510 = vpop.f32.mrb[0].mxu0
        %v2511 = vadd.f32 0.0, %v2510
        %v2512 = vpop.f32.mrb[0].mxu0
        %v2513 = vpop.f32.mrb[0].mxu0
        %v2514 = vpop.f32.mrb[0].mxu0
        %2515 = vdwg.mxu0
        %2516 = vmatprep.subr.bf16.mxu0 0
        %2517 = vmatpush1.bf16.msra.mxu0 %v1180
        %2518 = vmatprep.subr.bf16.mxu0 0
        %2519 = vmatpush1.bf16.msra.mxu0 %v1181
        %2520 = vmatprep.subr.bf16.mxu0 0
        %2521 = vmatpush1.bf16.msra.mxu0 %v1182
        %2522 = vmatprep.subr.bf16.mxu0 0
        %2523 = vmatpush1.bf16.msra.mxu0 %v1183
        %2524 = vmatprep.subr.bf16.mxu0 0
        %2525 = vmatpush1.bf16.msra.mxu0 %v1184
        %2526 = vmatprep.subr.bf16.mxu0 0
        %2527 = vmatpush1.bf16.msra.mxu0 %v1185
        %2528 = vmatprep.subr.bf16.mxu0 0
        %2529 = vmatpush1.bf16.msra.mxu0 %v1186
        %2530 = vmatprep.subr.bf16.mxu0 0
        %2531 = vmatpush1.bf16.msra.mxu0 %v1187
        %2532 = vmatprep.subr.bf16.mxu0 0
        %2533 = vmatpush1.bf16.msra.mxu0 0
        %2534 = vmatprep.subr.bf16.mxu0 0
        %2535 = vmatpush1.bf16.msra.mxu0 0
        %2536 = vmatprep.subr.bf16.mxu0 0
        %2537 = vmatpush1.bf16.msra.mxu0 0
        %2538 = vmatprep.subr.bf16.mxu0 0
        %2539 = vmatpush1.bf16.msra.mxu0 0
        %2540 = vmatprep.subr.bf16.mxu0 0
        %2541 = vmatpush1.bf16.msra.mxu0 0
        %2542 = vmatprep.subr.bf16.mxu0 0
        %2543 = vmatpush1.bf16.msra.mxu0 0
        %2544 = vmatprep.subr.bf16.mxu0 0
        %2545 = vmatpush1.bf16.msra.mxu0 0
        %2546 = vmatprep.subr.bf16.mxu0 0
        %2547 = vmatpush1.bf16.msra.mxu0 0
        %2548 = vmatprep.mubr.bf16.mxu0 0
        %2549 = vmatmul.mubr.bf16.gmra.mrb[0].mxu0 %v2434
        %v2550 = vpop.f32.mrb[0].mxu0
        %v2551 = vadd.f32 0.0, %v2550
        %v2552 = vpop.f32.mrb[0].mxu0
        %v2553 = vpop.f32.mrb[0].mxu0
        %v2554 = vpop.f32.mrb[0].mxu0
        %2555 = vdwg.mxu0
        %2556 = vmatprep.subr.bf16.mxu0 0
        %2557 = vmatpush1.bf16.msra.mxu0 %v1188
        %2558 = vmatprep.subr.bf16.mxu0 0
        %2559 = vmatpush1.bf16.msra.mxu0 %v1189
        %2560 = vmatprep.subr.bf16.mxu0 0
        %2561 = vmatpush1.bf16.msra.mxu0 %v1190
        %2562 = vmatprep.subr.bf16.mxu0 0
        %2563 = vmatpush1.bf16.msra.mxu0 %v1191
        %2564 = vmatprep.subr.bf16.mxu0 0
        %2565 = vmatpush1.bf16.msra.mxu0 %v1192
        %2566 = vmatprep.subr.bf16.mxu0 0
        %2567 = vmatpush1.bf16.msra.mxu0 %v1193
        %2568 = vmatprep.subr.bf16.mxu0 0
        %2569 = vmatpush1.bf16.msra.mxu0 %v1194
        %2570 = vmatprep.subr.bf16.mxu0 0
        %2571 = vmatpush1.bf16.msra.mxu0 %v1195
        %2572 = vmatprep.subr.bf16.mxu0 0
        %2573 = vmatpush1.bf16.msra.mxu0 0
        %2574 = vmatprep.subr.bf16.mxu0 0
        %2575 = vmatpush1.bf16.msra.mxu0 0
        %2576 = vmatprep.subr.bf16.mxu0 0
        %2577 = vmatpush1.bf16.msra.mxu0 0
        %2578 = vmatprep.subr.bf16.mxu0 0
        %2579 = vmatpush1.bf16.msra.mxu0 0
        %2580 = vmatprep.subr.bf16.mxu0 0
        %2581 = vmatpush1.bf16.msra.mxu0 0
        %2582 = vmatprep.subr.bf16.mxu0 0
        %2583 = vmatpush1.bf16.msra.mxu0 0
        %2584 = vmatprep.subr.bf16.mxu0 0
        %2585 = vmatpush1.bf16.msra.mxu0 0
        %2586 = vmatprep.subr.bf16.mxu0 0
        %2587 = vmatpush1.bf16.msra.mxu0 0
        %2588 = vmatprep.mubr.bf16.mxu0 0
        %2589 = vmatmul.mubr.bf16.gmra.mrb[0].mxu0 %v2435
        %v2590 = vpop.f32.mrb[0].mxu0
        %v2591 = vadd.f32 0.0, %v2590
        %v2592 = vpop.f32.mrb[0].mxu0
        %v2593 = vpop.f32.mrb[0].mxu0
        %v2594 = vpop.f32.mrb[0].mxu0
        %2595 = vdwg.mxu0
        %2596 = vst [vmem:[%s434] sm:$0xff] %v2471
        %2597 = vst [vmem:[%s434 + $0x8] sm:$0xff] %v2511
        %2598 = vst [vmem:[%s434 + $0x10] sm:$0xff] %v2551
        %2599 = vst [vmem:[%s434 + $0x18] sm:$0xff] %v2591
        %2600 = vst [vmem:[%s441] sm:$0xff] %v2428
        %2601 = vst [vmem:[%s441 + $0x8] sm:$0xff] %v2429
        %2602 = vst [vmem:[%s441 + $0x10] sm:$0xff] %v2430
        %2603 = vst [vmem:[%s441 + $0x18] sm:$0xff] %v2431
        %s2604 = sand.u32 %s199, 1
        %s2605 = scalar_lea.sflag [#allocation4], %s2604
        %s2606 = sand.u32 %s199, 1
        %s2607 = smul.addr %s2606, 32
        %s2608 = scalar_lea.vmem [#allocation12], %s2607
        %s2609 = sand.u32 %s225, 1
        %s2610 = scalar_lea.sflag [#allocation14], %s2609
        %s2611 = sand.u32 %s225, 1
        %s2612 = smul.addr %s2611, 32
        %s2613 = scalar_lea.vmem [#allocation13], %s2612
        // Predicated region
        $region69: #{tpu_custom_call.1} parent=47 // pred_check
          %p2614 = pneg %p209
        $region70: #{tpu_custom_call.1} parent=47 // pred_check_branch
          %2616 = sbr.rel (%p2614) target = $region72
        $region71: #{tpu_custom_call.1} parent=47 // pred_region
          %s2617 = smul.u32 4, %s34
          %s2619 = ssub.s32 512, 512
          %2620 = vsyncadd %s2605, %s2619
          %s2621 = smul.addr %s2617, 128
          %s2622 = scalar_lea.hbm %s7, %s2621
          %s2623 = sshll.u32 %s2608, 4
          %s2624 = int_to_ptr.vmem [resolvable:$true] %s2623
          %2629 = dma.vmem_to_hbm [thread:$0]  %s2624, 512, %s2622, %s2605, 128, 128, 8
        $region72: #{tpu_custom_call.1} parent=47 // pred_fallthru
          _
        // Predicated region
        $region73: #{tpu_custom_call.1} parent=47 // pred_check
          %p2630 = pneg %p235
        $region74: #{tpu_custom_call.1} parent=47 // pred_check_branch
          %2632 = sbr.rel (%p2630) target = $region76
        $region75: #{tpu_custom_call.1} parent=47 // pred_region
          %s2633 = smul.u32 4, %s34
          %s2635 = ssub.s32 512, 512
          %2636 = vsyncadd %s2610, %s2635
          %s2637 = smul.addr %s2633, 128
          %s2638 = scalar_lea.hbm %s8, %s2637
          %s2639 = sshll.u32 %s2613, 4
          %s2640 = int_to_ptr.vmem [resolvable:$true] %s2639
          %2645 = dma.vmem_to_hbm [thread:$0]  %s2640, 512, %s2638, %s2610, 128, 128, 8
        $region76: #{tpu_custom_call.1} parent=47 // pred_fallthru
          _
      $region48: #{tpu_custom_call.1} parent=5 // pred_fallthru
        _
      %p2646 = scmp.le.s32.totalorder 2, %s29
      // Predicated region
      $region77: #{tpu_custom_call.1} parent=5 // pred_check
        %p2647 = pneg %p2646
      $region78: #{tpu_custom_call.1} parent=5 // pred_check_branch
        %2649 = sbr.rel (%p2647) target = $region80
      $region79: #{tpu_custom_call.1} parent=5 // pred_region
        %s2650 = ssub.s32 %s29, 2
        // Predicated region
        $region81: #{tpu_custom_call.1} parent=79 // pred_check
          %p2651 = pneg %p215
        $region82: #{tpu_custom_call.1} parent=79 // pred_check_branch
          %2653 = sbr.rel (%p2651) target = $region84
        $region83: #{tpu_custom_call.1} parent=79 // pred_region
          %s2654 = sand.u32 %s200, 1
          %s2655 = scalar_lea.sflag [#allocation4], %s2654
          %s2656 = sand.u32 %s200, 1
          %s2657 = smul.addr %s2656, 32
          %s2658 = scalar_lea.vmem [#allocation12], %s2657
          %2659 = dma.done %s2655, 512
        $region84: #{tpu_custom_call.1} parent=79 // pred_fallthru
          _
        // Predicated region
        $region85: #{tpu_custom_call.1} parent=79 // pred_check
          %p2660 = pneg %p241
        $region86: #{tpu_custom_call.1} parent=79 // pred_check_branch
          %2662 = sbr.rel (%p2660) target = $region88
        $region87: #{tpu_custom_call.1} parent=79 // pred_region
          %s2663 = sand.u32 %s226, 1
          %s2664 = scalar_lea.sflag [#allocation14], %s2663
          %s2665 = sand.u32 %s226, 1
          %s2666 = smul.addr %s2665, 32
          %s2667 = scalar_lea.vmem [#allocation13], %s2666
          %2668 = dma.done %s2664, 512
        $region88: #{tpu_custom_call.1} parent=79 // pred_fallthru
          _
      $region80: #{tpu_custom_call.1} parent=5 // pred_fallthru
        _
    $region6: #{tpu_custom_call.1} parent=1 // loop_footer
      %s33 = sadd.s32 1, %s29
    $region7: #{tpu_custom_call.1} parent=1 // loop_footer_branch
      %28 = sbr.rel target = $region3
    $region8: #{tpu_custom_call.1} parent=1 // loop_exit
      _
    %2669 = vsyncpa [#allocation3], 1
    %s2670 = scalar_lea.sflag [#allocation3], 1
    %2671 = vsyncpa %s2670, 1
    %2672 = vsyncpa [#allocation8], 1
    %s2673 = scalar_lea.sflag [#allocation8], 1
    %2674 = vsyncpa %s2673, 1
    %2675 = vsyncpa [#allocation11], 1
    %2676 = vsyncpa [#allocation4], 1
    %s2677 = scalar_lea.sflag [#allocation4], 1
    %2678 = vsyncpa %s2677, 1
    %2679 = vsyncpa [#allocation14], 1
    %s2680 = scalar_lea.sflag [#allocation14], 1
    %2681 = vsyncpa %s2680, 1
    %2682 = vsyncpa [#allocation5], 1
    %s2683 = scalar_lea.sflag [#allocation5], 1
    %2684 = vsyncpa %s2683, 1

</llo_original>
